<compile_context>
chip_gen: v7x
topology: tpu7x:2x2x1
jax: 0.10.0
libtpu: 0.0.40
codegen_flags: <defaults>
</compile_context>

<pallas_src>
import functools

import jax
import jax.numpy as jnp
import numpy as np
from jax import lax
from jax.experimental import pallas as pl
from jax.experimental.pallas import tpu as pltpu


def _spiking_conv_kernel(thr_ref, x_ref, w_ref, b_ref, o_ref,
                         xext_ref, patch_ref, y_ref,
                         *, H, W, T, compute_dtype):
    """One grid step == one batch element.

    Refs:
      thr_ref   : SMEM (1,)                    spiking threshold (f32)
      x_ref     : [1, T, Cin, HW]              activations (input dtype, un-padded)
      w_ref     : [Cout, 9*Cin]                folded conv*BN weights, lane-packed (bf16)
      b_ref     : [Cout, 1]                    folded BN bias (f32)
      o_ref     : [1, T, Cout, HW]             spike_train output (bf16)
    Scratch:
      xext_ref  : [T, Cin, HW + 2*PAD]         zero-extended flat activations
      patch_ref : [9*Cin, T*HW]                im2col tile (compute dtype)
      y_ref     : [Cout, T*HW] f32             conv + BN pre-activations
    """
    HW = H * W
    PAD = W + 1                                   # covers max |flat shift| = W + 1
    Cin = x_ref.shape[2]
    Cout = o_ref.shape[2]
    thr = thr_ref[0]

    # ---- build the zero-extended activation slab in VMEM (no host-side pad) ----
    xext_ref[:, :, pl.ds(0, PAD)] = jnp.zeros((T, Cin, PAD), xext_ref.dtype)
    xext_ref[:, :, pl.ds(PAD + HW, PAD)] = jnp.zeros((T, Cin, PAD), xext_ref.dtype)
    xext_ref[:, :, pl.ds(PAD, HW)] = x_ref[0]

    # ---- 3x3 conv (pad=1) + folded BN as ONE K=9*Cin matmul over N = T*HW ----
    # Each 3x3 tap is a static lane slice of the extended slab; only the two
    # column-edge masks are needed (row over/underflow reads the zero extension).
    col = lax.broadcasted_iota(jnp.int32, (1, 1, HW), 2) % W
    not_left = col >= 1                            # valid output columns for dx = -1
    not_right = col < W - 1                        # valid output columns for dx = +1
    zero = jnp.zeros((), xext_ref.dtype)

    k = 0
    for dy in (-1, 0, 1):
        for dx in (-1, 0, 1):
            off = dy * W + dx
            tap = xext_ref[:, :, pl.ds(PAD + off, HW)]        # [T, Cin, HW]
            if dx == -1:
                tap = jnp.where(not_left, tap, zero)          # mask in input dtype
            elif dx == 1:
                tap = jnp.where(not_right, tap, zero)
            tap = tap.astype(compute_dtype)
            for t in range(T):                                # lane block t = timestep t
                patch_ref[pl.ds(k * Cin, Cin), pl.ds(t * HW, HW)] = tap[t]
            k += 1

    y_ref[...] = jnp.dot(w_ref[...], patch_ref[...],
                         preferred_element_type=jnp.float32) + b_ref[...]

    # ---- T-step spiking / inhibit recurrence (sign=True branch) ----
    mem0 = jnp.zeros((Cout, HW), jnp.float32) + 0.5 * thr
    ssum0 = jnp.zeros((Cout, HW), jnp.float32)

    def step(t, carry):
        mem, ssum = carry
        mem = mem + y_ref[:, pl.ds(t * HW, HW)]
        spikes = (mem >= thr).astype(jnp.float32)
        mem = mem - spikes * thr
        ssum = ssum + spikes
        inhibit = jnp.logical_and(mem <= -0.001, ssum > 0).astype(jnp.float32)
        mem = mem + inhibit * thr
        ssum = ssum - inhibit
        # spike_train[:, t] = spikes - inhibit ; the final "* threshold" folded in.
        o_ref[0, t] = ((spikes - inhibit) * thr).astype(o_ref.dtype)
        return mem, ssum

    if T <= 8:
        # Short recurrences: fully unrolled with static indices.
        carry = (mem0, ssum0)
        for t in range(T):
            carry = step(t, carry)
    else:
        # Long recurrences: keep the loop visible to bound live ranges.
        lax.fori_loop(0, T, step, (mem0, ssum0), unroll=True)


def fold_bn(conv_w, gamma, beta, mean, var, eps):
    # TODO(synk): only eval-mode BatchNorm (running stats) is folded; training-mode
    # batch statistics are not implemented.  The conv is assumed bias-free (ResNet).
    scale = (gamma / jnp.sqrt(var + eps)).astype(jnp.float32)
    w_folded = conv_w.astype(jnp.float32) * scale[:, None, None, None]
    bias = (beta - scale * mean).astype(jnp.float32)
    return w_folded, bias


def spiking_oneway_forward(x, conv_w, gamma, beta, mean, var, eps, act_alpha, *, T,
                           compute_dtype=jnp.bfloat16, out_dtype=jnp.bfloat16):
    """Forward pass of Spiking_Oneway (idem=False, sign=True, BN in eval mode).

    Output values are exactly {-thr, 0, +thr}; bf16 output (default) halves the
    dominant HBM write stream and is exact whenever thr is bf16-representable.
    """
    B, Tt, Cin, H, W = x.shape
    assert Tt == T
    Cout = conv_w.shape[0]
    HW = H * W
    PAD = W + 1

    w_folded, bias = fold_bn(conv_w, gamma, beta, mean, var, eps)
    # Lane-dense packed weights [Cout, 9*Cin]; row order = (tap k = ki*3+kj, cin).
    w_packed = jnp.transpose(w_folded, (0, 2, 3, 1)).reshape(Cout, 9 * Cin)
    w_packed = w_packed.astype(compute_dtype)
    bias = bias.reshape(Cout, 1)

    # Pure metadata reshape; x goes to the kernel un-padded and in its own dtype
    # (no extra XLA pad/cast pass over HBM).
    x_flat = x.reshape(B, T, Cin, HW)
    thr = jnp.asarray(act_alpha, jnp.float32).reshape(1)

    kernel = functools.partial(_spiking_conv_kernel, H=H, W=W, T=T,
                               compute_dtype=compute_dtype)
    # TODO(synk): for large B, pack several batch rows per block (bb > 1) so the
    # matmul N grows to bb*T*HW; for B == 1 on v7x add a second parallel split so
    # both TensorCores are used.
    out = pl.pallas_call(
        kernel,
        out_shape=jax.ShapeDtypeStruct((B, T, Cout, HW), out_dtype),
        grid_spec=pltpu.PrefetchScalarGridSpec(
            num_scalar_prefetch=0,
            grid=(B,),
            in_specs=[
                pl.BlockSpec(memory_space=pltpu.MemorySpace.SMEM),       # threshold
                pl.BlockSpec((1, T, Cin, HW), lambda b: (b, 0, 0, 0)),   # activations
                pl.BlockSpec((Cout, 9 * Cin), lambda b: (0, 0)),         # packed weights
                pl.BlockSpec((Cout, 1), lambda b: (0, 0)),               # folded bias
            ],
            out_specs=pl.BlockSpec((1, T, Cout, HW), lambda b: (b, 0, 0, 0)),
            scratch_shapes=[
                pltpu.VMEM((T, Cin, HW + 2 * PAD), x.dtype),    # zero-extended slab
                pltpu.VMEM((9 * Cin, T * HW), compute_dtype),   # im2col tile
                pltpu.VMEM((Cout, T * HW), jnp.float32),        # conv+BN pre-activations
            ],
        ),
        compiler_params=pltpu.CompilerParams(
            dimension_semantics=("parallel",),        # batch shards across TCs (v7x)
            vmem_limit_bytes=32 * 1024 * 1024,        # explicit; working set is tiny
        ),
    )(thr, x_flat, w_packed, bias)

    # Channel-major spatial flattening -> [B, T, Cout, H, W] is a free reshape.
    return out.reshape(B, T, Cout, H, W)


def _reference_forward(x, conv_w, gamma, beta, mean, var, eps, act_alpha, T,
                       compute_dtype=jnp.bfloat16):
    """Pure-JAX reference mirroring the kernel's tap packing and dtypes."""
    B, _, Cin, H, W = x.shape
    Cout = conv_w.shape[0]
    HW = H * W
    PAD = W + 1
    w_folded, bias = fold_bn(conv_w, gamma, beta, mean, var, eps)
    w_packed = jnp.transpose(w_folded, (0, 2, 3, 1)).reshape(Cout, 9 * Cin)
    w_packed = w_packed.astype(compute_dtype)

    xf = x.reshape(B, T, Cin, HW)
    x_ext = jnp.pad(xf, ((0, 0), (0, 0), (0, 0), (PAD, PAD)))
    col = jnp.arange(HW) % W
    pieces = []
    for dy in (-1, 0, 1):
        for dx in (-1, 0, 1):
            off = dy * W + dx
            p = lax.slice_in_dim(x_ext, PAD + off, PAD + off + HW, axis=3)
            if dx == -1:
                p = jnp.where((col >= 1)[None, None, None, :], p, 0.0)
            elif dx == 1:
                p = jnp.where((col < W - 1)[None, None, None, :], p, 0.0)
            pieces.append(p.astype(compute_dtype))
    patch = jnp.concatenate(pieces, axis=2)                  # [B, T, 9*Cin, HW]
    y = jnp.einsum('ok,btkp->btop', w_packed, patch,
                   preferred_element_type=jnp.float32)
    y = y + bias.reshape(1, 1, Cout, 1)

    thr = jnp.float32(act_alpha)
    membrane = jnp.full((B, Cout, HW), 0.5 * thr, jnp.float32)
    sum_spikes = jnp.zeros((B, Cout, HW), jnp.float32)
    outs = []
    for dt in range(T):
        membrane = membrane + y[:, dt]
        spikes = (membrane >= thr).astype(jnp.float32)
        membrane = membrane - spikes * thr
        sum_spikes = sum_spikes + spikes
        inhibit = ((membrane <= -0.001) & (sum_spikes > 0)).astype(jnp.float32)
        membrane = membrane + inhibit * thr
        sum_spikes = sum_spikes - inhibit
        outs.append(spikes - inhibit)
    st = jnp.stack(outs, axis=1) * thr
    return st.reshape(B, T, Cout, H, W)


if __name__ == "__main__":
    B, T, Cin, H, W = 2, 4, 4, 16, 16
    Cout = 8
    bn_eps = 1e-5
    act_alpha = 1.0          # relu.act_alpha.data (spiking threshold)

    key = jax.random.PRNGKey(0)
    k1, k2, k3, k4, k5, k6 = jax.random.split(key, 6)
    x = jax.random.normal(k1, (B, T, Cin, H, W), jnp.float32)
    conv_w = jax.random.normal(k2, (Cout, Cin, 3, 3), jnp.float32) * 0.2
    bn_gamma = jax.random.uniform(k3, (Cout,), jnp.float32, minval=0.5, maxval=1.5)
    bn_beta = jax.random.normal(k4, (Cout,), jnp.float32) * 0.1
    bn_mean = jax.random.normal(k5, (Cout,), jnp.float32) * 0.1
    bn_var = jax.random.uniform(k6, (Cout,), jnp.float32, minval=0.5, maxval=1.5)

    spike_train = spiking_oneway_forward(
        x, conv_w, bn_gamma, bn_beta, bn_mean, bn_var, bn_eps, act_alpha, T=T)
    spike_train = jax.block_until_ready(spike_train)
    assert spike_train.shape == (B, T, Cout, H, W)

    # Correctness: compare against a pure-JAX reference that mirrors the kernel's
    # bf16 conv inputs / f32 accumulation.  The spiking non-linearity is
    # discontinuous, so allow a tiny fraction of threshold-adjacent spike flips
    # (ulp-level accumulation-order differences) instead of a strict allclose.
    ref = _reference_forward(x, conv_w, bn_gamma, bn_beta, bn_mean, bn_var,
                             bn_eps, act_alpha, T)
    got = np.asarray(spike_train.astype(jnp.float32))
    diff = np.abs(got - np.asarray(ref, dtype=np.float32))
    mismatch_frac = float(np.mean(diff > 1e-3))
    assert mismatch_frac < 5e-3, f"spike mismatch fraction too high: {mismatch_frac}"

    print("KERNEL_OK")
</pallas_src>

<mosaic_0001>
module attributes {stable_mosaic.version = 11 : i64} {
  func.func @_spiking_conv_kernel(%arg0: i32, %arg1: memref<1xf32, #tpu.memory_space<smem>>, %arg2: memref<1x4x4x256xf32, #tpu.memory_space<vmem>>, %arg3: memref<8x36xbf16, #tpu.memory_space<vmem>>, %arg4: memref<8x1xf32, #tpu.memory_space<vmem>>, %arg5: memref<1x4x8x256xbf16, #tpu.memory_space<vmem>>, %arg6: memref<4x4x290xf32, #tpu.memory_space<vmem>>, %arg7: memref<36x1024xbf16, #tpu.memory_space<vmem>>, %arg8: memref<8x1024xf32, #tpu.memory_space<vmem>>) attributes {dimension_semantics = [#tpu.dimension_semantics<parallel>], iteration_bounds = array<i64: 2>, scalar_prefetch = 0 : i64, scratch_operands = 3 : i64, tpu.core_type = #tpu.core_type<tc>, window_params = [{transform_indices = @transform_0, window_bounds = array<i64: 1>}, {transform_indices = @transform_1, window_bounds = array<i64: 1, 4, 4, 256>}, {pipeline_mode = #tpu.pipeline_mode<synchronous>, transform_indices = @transform_2, window_bounds = array<i64: 8, 36>}, {pipeline_mode = #tpu.pipeline_mode<synchronous>, transform_indices = @transform_3, window_bounds = array<i64: 8, 1>}, {transform_indices = @transform_4, window_bounds = array<i64: 1, 4, 8, 256>}]} {
    %c0 = arith.constant 0 : index
    %0 = memref.load %arg1[%c0] : memref<1xf32, #tpu.memory_space<smem>>
    %cst = arith.constant 0.000000e+00 : f32
    %1 = vector.broadcast %cst : f32 to vector<4x4x17xf32>
    %c0_0 = arith.constant 0 : index
    %c0_1 = arith.constant 0 : index
    %c0_2 = arith.constant 0 : index
    %2 = vector.load %arg6[%c0_0, %c0_1, %c0_2] : memref<4x4x290xf32, #tpu.memory_space<vmem>>, vector<4x4x17xf32>
    tpu.vector_store %arg6[%c0_0, %c0_1, %c0_2], %1 {strides = array<i32>} : memref<4x4x290xf32, #tpu.memory_space<vmem>>, vector<4x4x17xf32>,
    %cst_3 = arith.constant 0.000000e+00 : f32
    %3 = vector.broadcast %cst_3 : f32 to vector<4x4x17xf32>
    %c0_4 = arith.constant 0 : index
    %c0_5 = arith.constant 0 : index
    %c273 = arith.constant 273 : index
    %4 = vector.load %arg6[%c0_4, %c0_5, %c273] : memref<4x4x290xf32, #tpu.memory_space<vmem>>, vector<4x4x17xf32>
    tpu.vector_store %arg6[%c0_4, %c0_5, %c273], %3 {strides = array<i32>} : memref<4x4x290xf32, #tpu.memory_space<vmem>>, vector<4x4x17xf32>,
    %c0_6 = arith.constant 0 : index
    %c0_7 = arith.constant 0 : index
    %c0_8 = arith.constant 0 : index
    %c0_9 = arith.constant 0 : index
    %5 = vector.load %arg2[%c0_6, %c0_7, %c0_8, %c0_9] : memref<1x4x4x256xf32, #tpu.memory_space<vmem>>, vector<1x4x4x256xf32>
    %6 = vector.shape_cast %5 : vector<1x4x4x256xf32> to vector<4x4x256xf32>
    %c0_10 = arith.constant 0 : index
    %c0_11 = arith.constant 0 : index
    %c17 = arith.constant 17 : index
    %7 = vector.load %arg6[%c0_10, %c0_11, %c17] : memref<4x4x290xf32, #tpu.memory_space<vmem>>, vector<4x4x256xf32>
    tpu.vector_store %arg6[%c0_10, %c0_11, %c17], %6 {strides = array<i32>} : memref<4x4x290xf32, #tpu.memory_space<vmem>>, vector<4x4x256xf32>,
    %8 = tpu.iota {dimensions = array<i32: 2>} : vector<1x1x256xi32>
    %c16_i32 = arith.constant 16 : i32
    %c0_i32 = arith.constant 0 : i32
    %9 = arith.cmpi eq, %c16_i32, %c0_i32 : i32
    %c1_i32 = arith.constant 1 : i32
    %10 = arith.select %9, %c1_i32, %c16_i32 : i32
    %11 = vector.broadcast %10 : i32 to vector<1x1x256xi32>
    %12 = arith.remsi %8, %11 : vector<1x1x256xi32>
    %c0_i32_12 = arith.constant 0 : i32
    %13 = vector.broadcast %c0_i32_12 : i32 to vector<1x1x256xi32>
    %14 = arith.cmpi ne, %12, %13 : vector<1x1x256xi32>
    %c0_i32_13 = arith.constant 0 : i32
    %15 = vector.broadcast %c0_i32_13 : i32 to vector<1x1x256xi32>
    %16 = arith.cmpi slt, %12, %15 : vector<1x1x256xi32>
    %c0_i32_14 = arith.constant 0 : i32
    %17 = arith.cmpi slt, %10, %c0_i32_14 : i32
    %18 = vector.broadcast %17 : i1 to vector<1x1x256xi1>
    %19 = vector.broadcast %18 : vector<1x1x256xi1> to vector<1x1x256xi1>
    %20 = arith.xori %16, %19 : vector<1x1x256xi1>
    %21 = arith.andi %20, %14 : vector<1x1x256xi1>
    %22 = vector.broadcast %10 : i32 to vector<1x1x256xi32>
    %23 = arith.addi %12, %22 : vector<1x1x256xi32>
    %24 = arith.select %21, %23, %12 : vector<1x1x256xi1>, vector<1x1x256xi32>
    %c1_i32_15 = arith.constant 1 : i32
    %25 = vector.broadcast %c1_i32_15 : i32 to vector<1x1x256xi32>
    %26 = arith.cmpi sge, %24, %25 : vector<1x1x256xi32>
    %c15_i32 = arith.constant 15 : i32
    %27 = vector.broadcast %c15_i32 : i32 to vector<1x1x256xi32>
    %28 = arith.cmpi slt, %24, %27 : vector<1x1x256xi32>
    %c0_16 = arith.constant 0 : index
    %c0_17 = arith.constant 0 : index
    %c0_18 = arith.constant 0 : index
    %29 = vector.load %arg6[%c0_16, %c0_17, %c0_18] : memref<4x4x290xf32, #tpu.memory_space<vmem>>, vector<4x4x256xf32>
    %cst_19 = arith.constant 0.000000e+00 : f32
    %30 = vector.shape_cast %26 : vector<1x1x256xi1> to vector<1x1x256xi1>
    %31 = vector.broadcast %30 : vector<1x1x256xi1> to vector<4x4x256xi1>
    %32 = vector.broadcast %cst_19 : f32 to vector<4x4x256xf32>
    %33 = arith.select %31, %29, %32 : vector<4x4x256xi1>, vector<4x4x256xf32>
    %34 = arith.truncf %33 : vector<4x4x256xf32> to vector<4x4x256xbf16>
    %35 = vector.extract_strided_slice %34 {offsets = [0, 0, 0], sizes = [1, 4, 256], strides = [1, 1, 1]} : vector<4x4x256xbf16> to vector<1x4x256xbf16>
    %36 = vector.shape_cast %35 : vector<1x4x256xbf16> to vector<4x256xbf16>
    %c0_20 = arith.constant 0 : index
    %c0_21 = arith.constant 0 : index
    %37 = vector.load %arg7[%c0_20, %c0_21] : memref<36x1024xbf16, #tpu.memory_space<vmem>>, vector<4x256xbf16>
    tpu.vector_store %arg7[%c0_20, %c0_21], %36 {strides = array<i32>} : memref<36x1024xbf16, #tpu.memory_space<vmem>>, vector<4x256xbf16>,
    %38 = vector.extract_strided_slice %34 {offsets = [1, 0, 0], sizes = [1, 4, 256], strides = [1, 1, 1]} : vector<4x4x256xbf16> to vector<1x4x256xbf16>
    %39 = vector.shape_cast %38 : vector<1x4x256xbf16> to vector<4x256xbf16>
    %c0_22 = arith.constant 0 : index
    %c256 = arith.constant 256 : index
    %40 = vector.load %arg7[%c0_22, %c256] : memref<36x1024xbf16, #tpu.memory_space<vmem>>, vector<4x256xbf16>
    tpu.vector_store %arg7[%c0_22, %c256], %39 {strides = array<i32>} : memref<36x1024xbf16, #tpu.memory_space<vmem>>, vector<4x256xbf16>,
    %41 = vector.extract_strided_slice %34 {offsets = [2, 0, 0], sizes = [1, 4, 256], strides = [1, 1, 1]} : vector<4x4x256xbf16> to vector<1x4x256xbf16>
    %42 = vector.shape_cast %41 : vector<1x4x256xbf16> to vector<4x256xbf16>
    %c0_23 = arith.constant 0 : index
    %c512 = arith.constant 512 : index
    %43 = vector.load %arg7[%c0_23, %c512] : memref<36x1024xbf16, #tpu.memory_space<vmem>>, vector<4x256xbf16>
    tpu.vector_store %arg7[%c0_23, %c512], %42 {strides = array<i32>} : memref<36x1024xbf16, #tpu.memory_space<vmem>>, vector<4x256xbf16>,
    %44 = vector.extract_strided_slice %34 {offsets = [3, 0, 0], sizes = [1, 4, 256], strides = [1, 1, 1]} : vector<4x4x256xbf16> to vector<1x4x256xbf16>
    %45 = vector.shape_cast %44 : vector<1x4x256xbf16> to vector<4x256xbf16>
    %c0_24 = arith.constant 0 : index
    %c768 = arith.constant 768 : index
    %46 = vector.load %arg7[%c0_24, %c768] : memref<36x1024xbf16, #tpu.memory_space<vmem>>, vector<4x256xbf16>
    tpu.vector_store %arg7[%c0_24, %c768], %45 {strides = array<i32>} : memref<36x1024xbf16, #tpu.memory_space<vmem>>, vector<4x256xbf16>,
    %c0_25 = arith.constant 0 : index
    %c0_26 = arith.constant 0 : index
    %c1 = arith.constant 1 : index
    %47 = vector.load %arg6[%c0_25, %c0_26, %c1] : memref<4x4x290xf32, #tpu.memory_space<vmem>>, vector<4x4x256xf32>
    %48 = arith.truncf %47 : vector<4x4x256xf32> to vector<4x4x256xbf16>
    %49 = vector.extract_strided_slice %48 {offsets = [0, 0, 0], sizes = [1, 4, 256], strides = [1, 1, 1]} : vector<4x4x256xbf16> to vector<1x4x256xbf16>
    %50 = vector.shape_cast %49 : vector<1x4x256xbf16> to vector<4x256xbf16>
    %c4 = arith.constant 4 : index
    %c0_27 = arith.constant 0 : index
    %51 = vector.load %arg7[%c4, %c0_27] : memref<36x1024xbf16, #tpu.memory_space<vmem>>, vector<4x256xbf16>
    tpu.vector_store %arg7[%c4, %c0_27], %50 {strides = array<i32>} : memref<36x1024xbf16, #tpu.memory_space<vmem>>, vector<4x256xbf16>,
    %52 = vector.extract_strided_slice %48 {offsets = [1, 0, 0], sizes = [1, 4, 256], strides = [1, 1, 1]} : vector<4x4x256xbf16> to vector<1x4x256xbf16>
    %53 = vector.shape_cast %52 : vector<1x4x256xbf16> to vector<4x256xbf16>
    %c4_28 = arith.constant 4 : index
    %c256_29 = arith.constant 256 : index
    %54 = vector.load %arg7[%c4_28, %c256_29] : memref<36x1024xbf16, #tpu.memory_space<vmem>>, vector<4x256xbf16>
    tpu.vector_store %arg7[%c4_28, %c256_29], %53 {strides = array<i32>} : memref<36x1024xbf16, #tpu.memory_space<vmem>>, vector<4x256xbf16>,
    %55 = vector.extract_strided_slice %48 {offsets = [2, 0, 0], sizes = [1, 4, 256], strides = [1, 1, 1]} : vector<4x4x256xbf16> to vector<1x4x256xbf16>
    %56 = vector.shape_cast %55 : vector<1x4x256xbf16> to vector<4x256xbf16>
    %c4_30 = arith.constant 4 : index
    %c512_31 = arith.constant 512 : index
    %57 = vector.load %arg7[%c4_30, %c512_31] : memref<36x1024xbf16, #tpu.memory_space<vmem>>, vector<4x256xbf16>
    tpu.vector_store %arg7[%c4_30, %c512_31], %56 {strides = array<i32>} : memref<36x1024xbf16, #tpu.memory_space<vmem>>, vector<4x256xbf16>,
    %58 = vector.extract_strided_slice %48 {offsets = [3, 0, 0], sizes = [1, 4, 256], strides = [1, 1, 1]} : vector<4x4x256xbf16> to vector<1x4x256xbf16>
    %59 = vector.shape_cast %58 : vector<1x4x256xbf16> to vector<4x256xbf16>
    %c4_32 = arith.constant 4 : index
    %c768_33 = arith.constant 768 : index
    %60 = vector.load %arg7[%c4_32, %c768_33] : memref<36x1024xbf16, #tpu.memory_space<vmem>>, vector<4x256xbf16>
    tpu.vector_store %arg7[%c4_32, %c768_33], %59 {strides = array<i32>} : memref<36x1024xbf16, #tpu.memory_space<vmem>>, vector<4x256xbf16>,
    %c0_34 = arith.constant 0 : index
    %c0_35 = arith.constant 0 : index
    %c2 = arith.constant 2 : index
    %61 = vector.load %arg6[%c0_34, %c0_35, %c2] : memref<4x4x290xf32, #tpu.memory_space<vmem>>, vector<4x4x256xf32>
    %cst_36 = arith.constant 0.000000e+00 : f32
    %62 = vector.shape_cast %28 : vector<1x1x256xi1> to vector<1x1x256xi1>
    %63 = vector.broadcast %62 : vector<1x1x256xi1> to vector<4x4x256xi1>
    %64 = vector.broadcast %cst_36 : f32 to vector<4x4x256xf32>
    %65 = arith.select %63, %61, %64 : vector<4x4x256xi1>, vector<4x4x256xf32>
    %66 = arith.truncf %65 : vector<4x4x256xf32> to vector<4x4x256xbf16>
    %67 = vector.extract_strided_slice %66 {offsets = [0, 0, 0], sizes = [1, 4, 256], strides = [1, 1, 1]} : vector<4x4x256xbf16> to vector<1x4x256xbf16>
    %68 = vector.shape_cast %67 : vector<1x4x256xbf16> to vector<4x256xbf16>
    %c8 = arith.constant 8 : index
    %c0_37 = arith.constant 0 : index
    %69 = vector.load %arg7[%c8, %c0_37] : memref<36x1024xbf16, #tpu.memory_space<vmem>>, vector<4x256xbf16>
    tpu.vector_store %arg7[%c8, %c0_37], %68 {strides = array<i32>} : memref<36x1024xbf16, #tpu.memory_space<vmem>>, vector<4x256xbf16>,
    %70 = vector.extract_strided_slice %66 {offsets = [1, 0, 0], sizes = [1, 4, 256], strides = [1, 1, 1]} : vector<4x4x256xbf16> to vector<1x4x256xbf16>
    %71 = vector.shape_cast %70 : vector<1x4x256xbf16> to vector<4x256xbf16>
    %c8_38 = arith.constant 8 : index
    %c256_39 = arith.constant 256 : index
    %72 = vector.load %arg7[%c8_38, %c256_39] : memref<36x1024xbf16, #tpu.memory_space<vmem>>, vector<4x256xbf16>
    tpu.vector_store %arg7[%c8_38, %c256_39], %71 {strides = array<i32>} : memref<36x1024xbf16, #tpu.memory_space<vmem>>, vector<4x256xbf16>,
    %73 = vector.extract_strided_slice %66 {offsets = [2, 0, 0], sizes = [1, 4, 256], strides = [1, 1, 1]} : vector<4x4x256xbf16> to vector<1x4x256xbf16>
    %74 = vector.shape_cast %73 : vector<1x4x256xbf16> to vector<4x256xbf16>
    %c8_40 = arith.constant 8 : index
    %c512_41 = arith.constant 512 : index
    %75 = vector.load %arg7[%c8_40, %c512_41] : memref<36x1024xbf16, #tpu.memory_space<vmem>>, vector<4x256xbf16>
    tpu.vector_store %arg7[%c8_40, %c512_41], %74 {strides = array<i32>} : memref<36x1024xbf16, #tpu.memory_space<vmem>>, vector<4x256xbf16>,
    %76 = vector.extract_strided_slice %66 {offsets = [3, 0, 0], sizes = [1, 4, 256], strides = [1, 1, 1]} : vector<4x4x256xbf16> to vector<1x4x256xbf16>
    %77 = vector.shape_cast %76 : vector<1x4x256xbf16> to vector<4x256xbf16>
    %c8_42 = arith.constant 8 : index
    %c768_43 = arith.constant 768 : index
    %78 = vector.load %arg7[%c8_42, %c768_43] : memref<36x1024xbf16, #tpu.memory_space<vmem>>, vector<4x256xbf16>
    tpu.vector_store %arg7[%c8_42, %c768_43], %77 {strides = array<i32>} : memref<36x1024xbf16, #tpu.memory_space<vmem>>, vector<4x256xbf16>,
    %c0_44 = arith.constant 0 : index
    %c0_45 = arith.constant 0 : index
    %c16 = arith.constant 16 : index
    %79 = vector.load %arg6[%c0_44, %c0_45, %c16] : memref<4x4x290xf32, #tpu.memory_space<vmem>>, vector<4x4x256xf32>
    %cst_46 = arith.constant 0.000000e+00 : f32
    %80 = vector.shape_cast %26 : vector<1x1x256xi1> to vector<1x1x256xi1>
    %81 = vector.broadcast %80 : vector<1x1x256xi1> to vector<4x4x256xi1>
    %82 = vector.broadcast %cst_46 : f32 to vector<4x4x256xf32>
    %83 = arith.select %81, %79, %82 : vector<4x4x256xi1>, vector<4x4x256xf32>
    %84 = arith.truncf %83 : vector<4x4x256xf32> to vector<4x4x256xbf16>
    %85 = vector.extract_strided_slice %84 {offsets = [0, 0, 0], sizes = [1, 4, 256], strides = [1, 1, 1]} : vector<4x4x256xbf16> to vector<1x4x256xbf16>
    %86 = vector.shape_cast %85 : vector<1x4x256xbf16> to vector<4x256xbf16>
    %c12 = arith.constant 12 : index
    %c0_47 = arith.constant 0 : index
    %87 = vector.load %arg7[%c12, %c0_47] : memref<36x1024xbf16, #tpu.memory_space<vmem>>, vector<4x256xbf16>
    tpu.vector_store %arg7[%c12, %c0_47], %86 {strides = array<i32>} : memref<36x1024xbf16, #tpu.memory_space<vmem>>, vector<4x256xbf16>,
    %88 = vector.extract_strided_slice %84 {offsets = [1, 0, 0], sizes = [1, 4, 256], strides = [1, 1, 1]} : vector<4x4x256xbf16> to vector<1x4x256xbf16>
    %89 = vector.shape_cast %88 : vector<1x4x256xbf16> to vector<4x256xbf16>
    %c12_48 = arith.constant 12 : index
    %c256_49 = arith.constant 256 : index
    %90 = vector.load %arg7[%c12_48, %c256_49] : memref<36x1024xbf16, #tpu.memory_space<vmem>>, vector<4x256xbf16>
    tpu.vector_store %arg7[%c12_48, %c256_49], %89 {strides = array<i32>} : memref<36x1024xbf16, #tpu.memory_space<vmem>>, vector<4x256xbf16>,
    %91 = vector.extract_strided_slice %84 {offsets = [2, 0, 0], sizes = [1, 4, 256], strides = [1, 1, 1]} : vector<4x4x256xbf16> to vector<1x4x256xbf16>
    %92 = vector.shape_cast %91 : vector<1x4x256xbf16> to vector<4x256xbf16>
    %c12_50 = arith.constant 12 : index
    %c512_51 = arith.constant 512 : index
    %93 = vector.load %arg7[%c12_50, %c512_51] : memref<36x1024xbf16, #tpu.memory_space<vmem>>, vector<4x256xbf16>
    tpu.vector_store %arg7[%c12_50, %c512_51], %92 {strides = array<i32>} : memref<36x1024xbf16, #tpu.memory_space<vmem>>, vector<4x256xbf16>,
    %94 = vector.extract_strided_slice %84 {offsets = [3, 0, 0], sizes = [1, 4, 256], strides = [1, 1, 1]} : vector<4x4x256xbf16> to vector<1x4x256xbf16>
    %95 = vector.shape_cast %94 : vector<1x4x256xbf16> to vector<4x256xbf16>
    %c12_52 = arith.constant 12 : index
    %c768_53 = arith.constant 768 : index
    %96 = vector.load %arg7[%c12_52, %c768_53] : memref<36x1024xbf16, #tpu.memory_space<vmem>>, vector<4x256xbf16>
    tpu.vector_store %arg7[%c12_52, %c768_53], %95 {strides = array<i32>} : memref<36x1024xbf16, #tpu.memory_space<vmem>>, vector<4x256xbf16>,
    %c0_54 = arith.constant 0 : index
    %c0_55 = arith.constant 0 : index
    %c17_56 = arith.constant 17 : index
    %97 = vector.load %arg6[%c0_54, %c0_55, %c17_56] : memref<4x4x290xf32, #tpu.memory_space<vmem>>, vector<4x4x256xf32>
    %98 = arith.truncf %97 : vector<4x4x256xf32> to vector<4x4x256xbf16>
    %99 = vector.extract_strided_slice %98 {offsets = [0, 0, 0], sizes = [1, 4, 256], strides = [1, 1, 1]} : vector<4x4x256xbf16> to vector<1x4x256xbf16>
    %100 = vector.shape_cast %99 : vector<1x4x256xbf16> to vector<4x256xbf16>
    %c16_57 = arith.constant 16 : index
    %c0_58 = arith.constant 0 : index
    %101 = vector.load %arg7[%c16_57, %c0_58] : memref<36x1024xbf16, #tpu.memory_space<vmem>>, vector<4x256xbf16>
    tpu.vector_store %arg7[%c16_57, %c0_58], %100 {strides = array<i32>} : memref<36x1024xbf16, #tpu.memory_space<vmem>>, vector<4x256xbf16>,
    %102 = vector.extract_strided_slice %98 {offsets = [1, 0, 0], sizes = [1, 4, 256], strides = [1, 1, 1]} : vector<4x4x256xbf16> to vector<1x4x256xbf16>
    %103 = vector.shape_cast %102 : vector<1x4x256xbf16> to vector<4x256xbf16>
    %c16_59 = arith.constant 16 : index
    %c256_60 = arith.constant 256 : index
    %104 = vector.load %arg7[%c16_59, %c256_60] : memref<36x1024xbf16, #tpu.memory_space<vmem>>, vector<4x256xbf16>
    tpu.vector_store %arg7[%c16_59, %c256_60], %103 {strides = array<i32>} : memref<36x1024xbf16, #tpu.memory_space<vmem>>, vector<4x256xbf16>,
    %105 = vector.extract_strided_slice %98 {offsets = [2, 0, 0], sizes = [1, 4, 256], strides = [1, 1, 1]} : vector<4x4x256xbf16> to vector<1x4x256xbf16>
    %106 = vector.shape_cast %105 : vector<1x4x256xbf16> to vector<4x256xbf16>
    %c16_61 = arith.constant 16 : index
    %c512_62 = arith.constant 512 : index
    %107 = vector.load %arg7[%c16_61, %c512_62] : memref<36x1024xbf16, #tpu.memory_space<vmem>>, vector<4x256xbf16>
    tpu.vector_store %arg7[%c16_61, %c512_62], %106 {strides = array<i32>} : memref<36x1024xbf16, #tpu.memory_space<vmem>>, vector<4x256xbf16>,
    %108 = vector.extract_strided_slice %98 {offsets = [3, 0, 0], sizes = [1, 4, 256], strides = [1, 1, 1]} : vector<4x4x256xbf16> to vector<1x4x256xbf16>
    %109 = vector.shape_cast %108 : vector<1x4x256xbf16> to vector<4x256xbf16>
    %c16_63 = arith.constant 16 : index
    %c768_64 = arith.constant 768 : index
    %110 = vector.load %arg7[%c16_63, %c768_64] : memref<36x1024xbf16, #tpu.memory_space<vmem>>, vector<4x256xbf16>
    tpu.vector_store %arg7[%c16_63, %c768_64], %109 {strides = array<i32>} : memref<36x1024xbf16, #tpu.memory_space<vmem>>, vector<4x256xbf16>,
    %c0_65 = arith.constant 0 : index
    %c0_66 = arith.constant 0 : index
    %c18 = arith.constant 18 : index
    %111 = vector.load %arg6[%c0_65, %c0_66, %c18] : memref<4x4x290xf32, #tpu.memory_space<vmem>>, vector<4x4x256xf32>
    %cst_67 = arith.constant 0.000000e+00 : f32
    %112 = vector.shape_cast %28 : vector<1x1x256xi1> to vector<1x1x256xi1>
    %113 = vector.broadcast %112 : vector<1x1x256xi1> to vector<4x4x256xi1>
    %114 = vector.broadcast %cst_67 : f32 to vector<4x4x256xf32>
    %115 = arith.select %113, %111, %114 : vector<4x4x256xi1>, vector<4x4x256xf32>
    %116 = arith.truncf %115 : vector<4x4x256xf32> to vector<4x4x256xbf16>
    %117 = vector.extract_strided_slice %116 {offsets = [0, 0, 0], sizes = [1, 4, 256], strides = [1, 1, 1]} : vector<4x4x256xbf16> to vector<1x4x256xbf16>
    %118 = vector.shape_cast %117 : vector<1x4x256xbf16> to vector<4x256xbf16>
    %c20 = arith.constant 20 : index
    %c0_68 = arith.constant 0 : index
    %119 = vector.load %arg7[%c20, %c0_68] : memref<36x1024xbf16, #tpu.memory_space<vmem>>, vector<4x256xbf16>
    tpu.vector_store %arg7[%c20, %c0_68], %118 {strides = array<i32>} : memref<36x1024xbf16, #tpu.memory_space<vmem>>, vector<4x256xbf16>,
    %120 = vector.extract_strided_slice %116 {offsets = [1, 0, 0], sizes = [1, 4, 256], strides = [1, 1, 1]} : vector<4x4x256xbf16> to vector<1x4x256xbf16>
    %121 = vector.shape_cast %120 : vector<1x4x256xbf16> to vector<4x256xbf16>
    %c20_69 = arith.constant 20 : index
    %c256_70 = arith.constant 256 : index
    %122 = vector.load %arg7[%c20_69, %c256_70] : memref<36x1024xbf16, #tpu.memory_space<vmem>>, vector<4x256xbf16>
    tpu.vector_store %arg7[%c20_69, %c256_70], %121 {strides = array<i32>} : memref<36x1024xbf16, #tpu.memory_space<vmem>>, vector<4x256xbf16>,
    %123 = vector.extract_strided_slice %116 {offsets = [2, 0, 0], sizes = [1, 4, 256], strides = [1, 1, 1]} : vector<4x4x256xbf16> to vector<1x4x256xbf16>
    %124 = vector.shape_cast %123 : vector<1x4x256xbf16> to vector<4x256xbf16>
    %c20_71 = arith.constant 20 : index
    %c512_72 = arith.constant 512 : index
    %125 = vector.load %arg7[%c20_71, %c512_72] : memref<36x1024xbf16, #tpu.memory_space<vmem>>, vector<4x256xbf16>
    tpu.vector_store %arg7[%c20_71, %c512_72], %124 {strides = array<i32>} : memref<36x1024xbf16, #tpu.memory_space<vmem>>, vector<4x256xbf16>,
    %126 = vector.extract_strided_slice %116 {offsets = [3, 0, 0], sizes = [1, 4, 256], strides = [1, 1, 1]} : vector<4x4x256xbf16> to vector<1x4x256xbf16>
    %127 = vector.shape_cast %126 : vector<1x4x256xbf16> to vector<4x256xbf16>
    %c20_73 = arith.constant 20 : index
    %c768_74 = arith.constant 768 : index
    %128 = vector.load %arg7[%c20_73, %c768_74] : memref<36x1024xbf16, #tpu.memory_space<vmem>>, vector<4x256xbf16>
    tpu.vector_store %arg7[%c20_73, %c768_74], %127 {strides = array<i32>} : memref<36x1024xbf16, #tpu.memory_space<vmem>>, vector<4x256xbf16>,
    %c0_75 = arith.constant 0 : index
    %c0_76 = arith.constant 0 : index
    %c32 = arith.constant 32 : index
    %129 = vector.load %arg6[%c0_75, %c0_76, %c32] : memref<4x4x290xf32, #tpu.memory_space<vmem>>, vector<4x4x256xf32>
    %cst_77 = arith.constant 0.000000e+00 : f32
    %130 = vector.shape_cast %26 : vector<1x1x256xi1> to vector<1x1x256xi1>
    %131 = vector.broadcast %130 : vector<1x1x256xi1> to vector<4x4x256xi1>
    %132 = vector.broadcast %cst_77 : f32 to vector<4x4x256xf32>
    %133 = arith.select %131, %129, %132 : vector<4x4x256xi1>, vector<4x4x256xf32>
    %134 = arith.truncf %133 : vector<4x4x256xf32> to vector<4x4x256xbf16>
    %135 = vector.extract_strided_slice %134 {offsets = [0, 0, 0], sizes = [1, 4, 256], strides = [1, 1, 1]} : vector<4x4x256xbf16> to vector<1x4x256xbf16>
    %136 = vector.shape_cast %135 : vector<1x4x256xbf16> to vector<4x256xbf16>
    %c24 = arith.constant 24 : index
    %c0_78 = arith.constant 0 : index
    %137 = vector.load %arg7[%c24, %c0_78] : memref<36x1024xbf16, #tpu.memory_space<vmem>>, vector<4x256xbf16>
    tpu.vector_store %arg7[%c24, %c0_78], %136 {strides = array<i32>} : memref<36x1024xbf16, #tpu.memory_space<vmem>>, vector<4x256xbf16>,
    %138 = vector.extract_strided_slice %134 {offsets = [1, 0, 0], sizes = [1, 4, 256], strides = [1, 1, 1]} : vector<4x4x256xbf16> to vector<1x4x256xbf16>
    %139 = vector.shape_cast %138 : vector<1x4x256xbf16> to vector<4x256xbf16>
    %c24_79 = arith.constant 24 : index
    %c256_80 = arith.constant 256 : index
    %140 = vector.load %arg7[%c24_79, %c256_80] : memref<36x1024xbf16, #tpu.memory_space<vmem>>, vector<4x256xbf16>
    tpu.vector_store %arg7[%c24_79, %c256_80], %139 {strides = array<i32>} : memref<36x1024xbf16, #tpu.memory_space<vmem>>, vector<4x256xbf16>,
    %141 = vector.extract_strided_slice %134 {offsets = [2, 0, 0], sizes = [1, 4, 256], strides = [1, 1, 1]} : vector<4x4x256xbf16> to vector<1x4x256xbf16>
    %142 = vector.shape_cast %141 : vector<1x4x256xbf16> to vector<4x256xbf16>
    %c24_81 = arith.constant 24 : index
    %c512_82 = arith.constant 512 : index
    %143 = vector.load %arg7[%c24_81, %c512_82] : memref<36x1024xbf16, #tpu.memory_space<vmem>>, vector<4x256xbf16>
    tpu.vector_store %arg7[%c24_81, %c512_82], %142 {strides = array<i32>} : memref<36x1024xbf16, #tpu.memory_space<vmem>>, vector<4x256xbf16>,
    %144 = vector.extract_strided_slice %134 {offsets = [3, 0, 0], sizes = [1, 4, 256], strides = [1, 1, 1]} : vector<4x4x256xbf16> to vector<1x4x256xbf16>
    %145 = vector.shape_cast %144 : vector<1x4x256xbf16> to vector<4x256xbf16>
    %c24_83 = arith.constant 24 : index
    %c768_84 = arith.constant 768 : index
    %146 = vector.load %arg7[%c24_83, %c768_84] : memref<36x1024xbf16, #tpu.memory_space<vmem>>, vector<4x256xbf16>
    tpu.vector_store %arg7[%c24_83, %c768_84], %145 {strides = array<i32>} : memref<36x1024xbf16, #tpu.memory_space<vmem>>, vector<4x256xbf16>,
    %c0_85 = arith.constant 0 : index
    %c0_86 = arith.constant 0 : index
    %c33 = arith.constant 33 : index
    %147 = vector.load %arg6[%c0_85, %c0_86, %c33] : memref<4x4x290xf32, #tpu.memory_space<vmem>>, vector<4x4x256xf32>
    %148 = arith.truncf %147 : vector<4x4x256xf32> to vector<4x4x256xbf16>
    %149 = vector.extract_strided_slice %148 {offsets = [0, 0, 0], sizes = [1, 4, 256], strides = [1, 1, 1]} : vector<4x4x256xbf16> to vector<1x4x256xbf16>
    %150 = vector.shape_cast %149 : vector<1x4x256xbf16> to vector<4x256xbf16>
    %c28 = arith.constant 28 : index
    %c0_87 = arith.constant 0 : index
    %151 = vector.load %arg7[%c28, %c0_87] : memref<36x1024xbf16, #tpu.memory_space<vmem>>, vector<4x256xbf16>
    tpu.vector_store %arg7[%c28, %c0_87], %150 {strides = array<i32>} : memref<36x1024xbf16, #tpu.memory_space<vmem>>, vector<4x256xbf16>,
    %152 = vector.extract_strided_slice %148 {offsets = [1, 0, 0], sizes = [1, 4, 256], strides = [1, 1, 1]} : vector<4x4x256xbf16> to vector<1x4x256xbf16>
    %153 = vector.shape_cast %152 : vector<1x4x256xbf16> to vector<4x256xbf16>
    %c28_88 = arith.constant 28 : index
    %c256_89 = arith.constant 256 : index
    %154 = vector.load %arg7[%c28_88, %c256_89] : memref<36x1024xbf16, #tpu.memory_space<vmem>>, vector<4x256xbf16>
    tpu.vector_store %arg7[%c28_88, %c256_89], %153 {strides = array<i32>} : memref<36x1024xbf16, #tpu.memory_space<vmem>>, vector<4x256xbf16>,
    %155 = vector.extract_strided_slice %148 {offsets = [2, 0, 0], sizes = [1, 4, 256], strides = [1, 1, 1]} : vector<4x4x256xbf16> to vector<1x4x256xbf16>
    %156 = vector.shape_cast %155 : vector<1x4x256xbf16> to vector<4x256xbf16>
    %c28_90 = arith.constant 28 : index
    %c512_91 = arith.constant 512 : index
    %157 = vector.load %arg7[%c28_90, %c512_91] : memref<36x1024xbf16, #tpu.memory_space<vmem>>, vector<4x256xbf16>
    tpu.vector_store %arg7[%c28_90, %c512_91], %156 {strides = array<i32>} : memref<36x1024xbf16, #tpu.memory_space<vmem>>, vector<4x256xbf16>,
    %158 = vector.extract_strided_slice %148 {offsets = [3, 0, 0], sizes = [1, 4, 256], strides = [1, 1, 1]} : vector<4x4x256xbf16> to vector<1x4x256xbf16>
    %159 = vector.shape_cast %158 : vector<1x4x256xbf16> to vector<4x256xbf16>
    %c28_92 = arith.constant 28 : index
    %c768_93 = arith.constant 768 : index
    %160 = vector.load %arg7[%c28_92, %c768_93] : memref<36x1024xbf16, #tpu.memory_space<vmem>>, vector<4x256xbf16>
    tpu.vector_store %arg7[%c28_92, %c768_93], %159 {strides = array<i32>} : memref<36x1024xbf16, #tpu.memory_space<vmem>>, vector<4x256xbf16>,
    %c0_94 = arith.constant 0 : index
    %c0_95 = arith.constant 0 : index
    %c34 = arith.constant 34 : index
    %161 = vector.load %arg6[%c0_94, %c0_95, %c34] : memref<4x4x290xf32, #tpu.memory_space<vmem>>, vector<4x4x256xf32>
    %cst_96 = arith.constant 0.000000e+00 : f32
    %162 = vector.shape_cast %28 : vector<1x1x256xi1> to vector<1x1x256xi1>
    %163 = vector.broadcast %162 : vector<1x1x256xi1> to vector<4x4x256xi1>
    %164 = vector.broadcast %cst_96 : f32 to vector<4x4x256xf32>
    %165 = arith.select %163, %161, %164 : vector<4x4x256xi1>, vector<4x4x256xf32>
    %166 = arith.truncf %165 : vector<4x4x256xf32> to vector<4x4x256xbf16>
    %167 = vector.extract_strided_slice %166 {offsets = [0, 0, 0], sizes = [1, 4, 256], strides = [1, 1, 1]} : vector<4x4x256xbf16> to vector<1x4x256xbf16>
    %168 = vector.shape_cast %167 : vector<1x4x256xbf16> to vector<4x256xbf16>
    %c32_97 = arith.constant 32 : index
    %c0_98 = arith.constant 0 : index
    %169 = vector.load %arg7[%c32_97, %c0_98] : memref<36x1024xbf16, #tpu.memory_space<vmem>>, vector<4x256xbf16>
    tpu.vector_store %arg7[%c32_97, %c0_98], %168 {strides = array<i32>} : memref<36x1024xbf16, #tpu.memory_space<vmem>>, vector<4x256xbf16>,
    %170 = vector.extract_strided_slice %166 {offsets = [1, 0, 0], sizes = [1, 4, 256], strides = [1, 1, 1]} : vector<4x4x256xbf16> to vector<1x4x256xbf16>
    %171 = vector.shape_cast %170 : vector<1x4x256xbf16> to vector<4x256xbf16>
    %c32_99 = arith.constant 32 : index
    %c256_100 = arith.constant 256 : index
    %172 = vector.load %arg7[%c32_99, %c256_100] : memref<36x1024xbf16, #tpu.memory_space<vmem>>, vector<4x256xbf16>
    tpu.vector_store %arg7[%c32_99, %c256_100], %171 {strides = array<i32>} : memref<36x1024xbf16, #tpu.memory_space<vmem>>, vector<4x256xbf16>,
    %173 = vector.extract_strided_slice %166 {offsets = [2, 0, 0], sizes = [1, 4, 256], strides = [1, 1, 1]} : vector<4x4x256xbf16> to vector<1x4x256xbf16>
    %174 = vector.shape_cast %173 : vector<1x4x256xbf16> to vector<4x256xbf16>
    %c32_101 = arith.constant 32 : index
    %c512_102 = arith.constant 512 : index
    %175 = vector.load %arg7[%c32_101, %c512_102] : memref<36x1024xbf16, #tpu.memory_space<vmem>>, vector<4x256xbf16>
    tpu.vector_store %arg7[%c32_101, %c512_102], %174 {strides = array<i32>} : memref<36x1024xbf16, #tpu.memory_space<vmem>>, vector<4x256xbf16>,
    %176 = vector.extract_strided_slice %166 {offsets = [3, 0, 0], sizes = [1, 4, 256], strides = [1, 1, 1]} : vector<4x4x256xbf16> to vector<1x4x256xbf16>
    %177 = vector.shape_cast %176 : vector<1x4x256xbf16> to vector<4x256xbf16>
    %c32_103 = arith.constant 32 : index
    %c768_104 = arith.constant 768 : index
    %178 = vector.load %arg7[%c32_103, %c768_104] : memref<36x1024xbf16, #tpu.memory_space<vmem>>, vector<4x256xbf16>
    tpu.vector_store %arg7[%c32_103, %c768_104], %177 {strides = array<i32>} : memref<36x1024xbf16, #tpu.memory_space<vmem>>, vector<4x256xbf16>,
    %c0_105 = arith.constant 0 : index
    %c0_106 = arith.constant 0 : index
    %179 = vector.load %arg3[%c0_105, %c0_106] : memref<8x36xbf16, #tpu.memory_space<vmem>>, vector<8x36xbf16>
    %c0_107 = arith.constant 0 : index
    %c0_108 = arith.constant 0 : index
    %180 = vector.load %arg7[%c0_107, %c0_108] : memref<36x1024xbf16, #tpu.memory_space<vmem>>, vector<36x1024xbf16>
    %cst_109 = arith.constant dense<0.000000e+00> : vector<8x1024xf32>
    %181 = tpu.matmul %179, %180, %cst_109 {dimension_numbers = #tpu.dot_dimension_numbers<[1], [0], [0], [1], [0, 0, 1, 1], [], []>} : vector<8x36xbf16>, vector<36x1024xbf16>, vector<8x1024xf32> -> vector<8x1024xf32>
    %c0_110 = arith.constant 0 : index
    %c0_111 = arith.constant 0 : index
    %182 = vector.load %arg4[%c0_110, %c0_111] : memref<8x1xf32, #tpu.memory_space<vmem>>, vector<8x1xf32>
    %183 = vector.broadcast %182 : vector<8x1xf32> to vector<8x1024xf32>
    %184 = arith.addf %181, %183 : vector<8x1024xf32>
    %c0_112 = arith.constant 0 : index
    %c0_113 = arith.constant 0 : index
    %185 = vector.load %arg8[%c0_112, %c0_113] : memref<8x1024xf32, #tpu.memory_space<vmem>>, vector<8x1024xf32>
    tpu.vector_store %arg8[%c0_112, %c0_113], %184 {strides = array<i32>} : memref<8x1024xf32, #tpu.memory_space<vmem>>, vector<8x1024xf32>,
    %cst_114 = arith.constant 0.000000e+00 : f32
    %186 = vector.broadcast %cst_114 : f32 to vector<8x256xf32>
    %cst_115 = arith.constant 5.000000e-01 : f32
    %187 = arith.mulf %cst_115, %0 : f32
    %188 = vector.broadcast %187 : f32 to vector<8x256xf32>
    %189 = arith.addf %186, %188 : vector<8x256xf32>
    %cst_116 = arith.constant 0.000000e+00 : f32
    %190 = vector.broadcast %cst_116 : f32 to vector<8x256xf32>
    %c0_117 = arith.constant 0 : index
    %c0_118 = arith.constant 0 : index
    %191 = vector.load %arg8[%c0_117, %c0_118] : memref<8x1024xf32, #tpu.memory_space<vmem>>, vector<8x256xf32>
    %192 = arith.addf %189, %191 : vector<8x256xf32>
    %193 = vector.broadcast %0 : f32 to vector<8x256xf32>
    %194 = arith.cmpf oge, %192, %193 : vector<8x256xf32>
    %195 = arith.extui %194 : vector<8x256xi1> to vector<8x256xi32>
    %196 = arith.sitofp %195 : vector<8x256xi32> to vector<8x256xf32>
    %197 = vector.broadcast %0 : f32 to vector<8x256xf32>
    %198 = arith.mulf %196, %197 : vector<8x256xf32>
    %199 = arith.subf %192, %198 : vector<8x256xf32>
    %200 = arith.addf %190, %196 : vector<8x256xf32>
    %cst_119 = arith.constant -1.000000e-03 : f32
    %201 = vector.broadcast %cst_119 : f32 to vector<8x256xf32>
    %202 = arith.cmpf ole, %199, %201 : vector<8x256xf32>
    %cst_120 = arith.constant 0.000000e+00 : f32
    %203 = vector.broadcast %cst_120 : f32 to vector<8x256xf32>
    %204 = arith.cmpf ogt, %200, %203 : vector<8x256xf32>
    %205 = arith.andi %202, %204 : vector<8x256xi1>
    %206 = arith.extui %205 : vector<8x256xi1> to vector<8x256xi32>
    %207 = arith.sitofp %206 : vector<8x256xi32> to vector<8x256xf32>
    %208 = vector.broadcast %0 : f32 to vector<8x256xf32>
    %209 = arith.mulf %207, %208 : vector<8x256xf32>
    %210 = arith.addf %199, %209 : vector<8x256xf32>
    %211 = arith.subf %200, %207 : vector<8x256xf32>
    %212 = arith.subf %196, %207 : vector<8x256xf32>
    %213 = vector.broadcast %0 : f32 to vector<8x256xf32>
    %214 = arith.mulf %212, %213 : vector<8x256xf32>
    %215 = arith.truncf %214 : vector<8x256xf32> to vector<8x256xbf16>
    %c0_121 = arith.constant 0 : index
    %c0_122 = arith.constant 0 : index
    %c0_123 = arith.constant 0 : index
    %c0_124 = arith.constant 0 : index
    %216 = vector.load %arg5[%c0_121, %c0_122, %c0_123, %c0_124] : memref<1x4x8x256xbf16, #tpu.memory_space<vmem>>, vector<1x1x8x256xbf16>
    %217 = vector.shape_cast %216 : vector<1x1x8x256xbf16> to vector<8x256xbf16>
    %218 = vector.shape_cast %215 : vector<8x256xbf16> to vector<1x1x8x256xbf16>
    tpu.vector_store %arg5[%c0_121, %c0_122, %c0_123, %c0_124], %218 {strides = array<i32>} : memref<1x4x8x256xbf16, #tpu.memory_space<vmem>>, vector<1x1x8x256xbf16>,
    %c0_125 = arith.constant 0 : index
    %c256_126 = arith.constant 256 : index
    %219 = vector.load %arg8[%c0_125, %c256_126] : memref<8x1024xf32, #tpu.memory_space<vmem>>, vector<8x256xf32>
    %220 = arith.addf %210, %219 : vector<8x256xf32>
    %221 = vector.broadcast %0 : f32 to vector<8x256xf32>
    %222 = arith.cmpf oge, %220, %221 : vector<8x256xf32>
    %223 = arith.extui %222 : vector<8x256xi1> to vector<8x256xi32>
    %224 = arith.sitofp %223 : vector<8x256xi32> to vector<8x256xf32>
    %225 = vector.broadcast %0 : f32 to vector<8x256xf32>
    %226 = arith.mulf %224, %225 : vector<8x256xf32>
    %227 = arith.subf %220, %226 : vector<8x256xf32>
    %228 = arith.addf %211, %224 : vector<8x256xf32>
    %cst_127 = arith.constant -1.000000e-03 : f32
    %229 = vector.broadcast %cst_127 : f32 to vector<8x256xf32>
    %230 = arith.cmpf ole, %227, %229 : vector<8x256xf32>
    %cst_128 = arith.constant 0.000000e+00 : f32
    %231 = vector.broadcast %cst_128 : f32 to vector<8x256xf32>
    %232 = arith.cmpf ogt, %228, %231 : vector<8x256xf32>
    %233 = arith.andi %230, %232 : vector<8x256xi1>
    %234 = arith.extui %233 : vector<8x256xi1> to vector<8x256xi32>
    %235 = arith.sitofp %234 : vector<8x256xi32> to vector<8x256xf32>
    %236 = vector.broadcast %0 : f32 to vector<8x256xf32>
    %237 = arith.mulf %235, %236 : vector<8x256xf32>
    %238 = arith.addf %227, %237 : vector<8x256xf32>
    %239 = arith.subf %228, %235 : vector<8x256xf32>
    %240 = arith.subf %224, %235 : vector<8x256xf32>
    %241 = vector.broadcast %0 : f32 to vector<8x256xf32>
    %242 = arith.mulf %240, %241 : vector<8x256xf32>
    %243 = arith.truncf %242 : vector<8x256xf32> to vector<8x256xbf16>
    %c0_129 = arith.constant 0 : index
    %c1_130 = arith.constant 1 : index
    %c0_131 = arith.constant 0 : index
    %c0_132 = arith.constant 0 : index
    %244 = vector.load %arg5[%c0_129, %c1_130, %c0_131, %c0_132] : memref<1x4x8x256xbf16, #tpu.memory_space<vmem>>, vector<1x1x8x256xbf16>
    %245 = vector.shape_cast %244 : vector<1x1x8x256xbf16> to vector<8x256xbf16>
    %246 = vector.shape_cast %243 : vector<8x256xbf16> to vector<1x1x8x256xbf16>
    tpu.vector_store %arg5[%c0_129, %c1_130, %c0_131, %c0_132], %246 {strides = array<i32>} : memref<1x4x8x256xbf16, #tpu.memory_space<vmem>>, vector<1x1x8x256xbf16>,
    %c0_133 = arith.constant 0 : index
    %c512_134 = arith.constant 512 : index
    %247 = vector.load %arg8[%c0_133, %c512_134] : memref<8x1024xf32, #tpu.memory_space<vmem>>, vector<8x256xf32>
    %248 = arith.addf %238, %247 : vector<8x256xf32>
    %249 = vector.broadcast %0 : f32 to vector<8x256xf32>
    %250 = arith.cmpf oge, %248, %249 : vector<8x256xf32>
    %251 = arith.extui %250 : vector<8x256xi1> to vector<8x256xi32>
    %252 = arith.sitofp %251 : vector<8x256xi32> to vector<8x256xf32>
    %253 = vector.broadcast %0 : f32 to vector<8x256xf32>
    %254 = arith.mulf %252, %253 : vector<8x256xf32>
    %255 = arith.subf %248, %254 : vector<8x256xf32>
    %256 = arith.addf %239, %252 : vector<8x256xf32>
    %cst_135 = arith.constant -1.000000e-03 : f32
    %257 = vector.broadcast %cst_135 : f32 to vector<8x256xf32>
    %258 = arith.cmpf ole, %255, %257 : vector<8x256xf32>
    %cst_136 = arith.constant 0.000000e+00 : f32
    %259 = vector.broadcast %cst_136 : f32 to vector<8x256xf32>
    %260 = arith.cmpf ogt, %256, %259 : vector<8x256xf32>
    %261 = arith.andi %258, %260 : vector<8x256xi1>
    %262 = arith.extui %261 : vector<8x256xi1> to vector<8x256xi32>
    %263 = arith.sitofp %262 : vector<8x256xi32> to vector<8x256xf32>
    %264 = vector.broadcast %0 : f32 to vector<8x256xf32>
    %265 = arith.mulf %263, %264 : vector<8x256xf32>
    %266 = arith.addf %255, %265 : vector<8x256xf32>
    %267 = arith.subf %256, %263 : vector<8x256xf32>
    %268 = arith.subf %252, %263 : vector<8x256xf32>
    %269 = vector.broadcast %0 : f32 to vector<8x256xf32>
    %270 = arith.mulf %268, %269 : vector<8x256xf32>
    %271 = arith.truncf %270 : vector<8x256xf32> to vector<8x256xbf16>
    %c0_137 = arith.constant 0 : index
    %c2_138 = arith.constant 2 : index
    %c0_139 = arith.constant 0 : index
    %c0_140 = arith.constant 0 : index
    %272 = vector.load %arg5[%c0_137, %c2_138, %c0_139, %c0_140] : memref<1x4x8x256xbf16, #tpu.memory_space<vmem>>, vector<1x1x8x256xbf16>
    %273 = vector.shape_cast %272 : vector<1x1x8x256xbf16> to vector<8x256xbf16>
    %274 = vector.shape_cast %271 : vector<8x256xbf16> to vector<1x1x8x256xbf16>
    tpu.vector_store %arg5[%c0_137, %c2_138, %c0_139, %c0_140], %274 {strides = array<i32>} : memref<1x4x8x256xbf16, #tpu.memory_space<vmem>>, vector<1x1x8x256xbf16>,
    %c0_141 = arith.constant 0 : index
    %c768_142 = arith.constant 768 : index
    %275 = vector.load %arg8[%c0_141, %c768_142] : memref<8x1024xf32, #tpu.memory_space<vmem>>, vector<8x256xf32>
    %276 = arith.addf %266, %275 : vector<8x256xf32>
    %277 = vector.broadcast %0 : f32 to vector<8x256xf32>
    %278 = arith.cmpf oge, %276, %277 : vector<8x256xf32>
    %279 = arith.extui %278 : vector<8x256xi1> to vector<8x256xi32>
    %280 = arith.sitofp %279 : vector<8x256xi32> to vector<8x256xf32>
    %281 = vector.broadcast %0 : f32 to vector<8x256xf32>
    %282 = arith.mulf %280, %281 : vector<8x256xf32>
    %283 = arith.subf %276, %282 : vector<8x256xf32>
    %284 = arith.addf %267, %280 : vector<8x256xf32>
    %cst_143 = arith.constant -1.000000e-03 : f32
    %285 = vector.broadcast %cst_143 : f32 to vector<8x256xf32>
    %286 = arith.cmpf ole, %283, %285 : vector<8x256xf32>
    %cst_144 = arith.constant 0.000000e+00 : f32
    %287 = vector.broadcast %cst_144 : f32 to vector<8x256xf32>
    %288 = arith.cmpf ogt, %284, %287 : vector<8x256xf32>
    %289 = arith.andi %286, %288 : vector<8x256xi1>
    %290 = arith.extui %289 : vector<8x256xi1> to vector<8x256xi32>
    %291 = arith.sitofp %290 : vector<8x256xi32> to vector<8x256xf32>
    %292 = arith.subf %280, %291 : vector<8x256xf32>
    %293 = vector.broadcast %0 : f32 to vector<8x256xf32>
    %294 = arith.mulf %292, %293 : vector<8x256xf32>
    %295 = arith.truncf %294 : vector<8x256xf32> to vector<8x256xbf16>
    %c0_145 = arith.constant 0 : index
    %c3 = arith.constant 3 : index
    %c0_146 = arith.constant 0 : index
    %c0_147 = arith.constant 0 : index
    %296 = vector.load %arg5[%c0_145, %c3, %c0_146, %c0_147] : memref<1x4x8x256xbf16, #tpu.memory_space<vmem>>, vector<1x1x8x256xbf16>
    %297 = vector.shape_cast %296 : vector<1x1x8x256xbf16> to vector<8x256xbf16>
    %298 = vector.shape_cast %295 : vector<8x256xbf16> to vector<1x1x8x256xbf16>
    tpu.vector_store %arg5[%c0_145, %c3, %c0_146, %c0_147], %298 {strides = array<i32>} : memref<1x4x8x256xbf16, #tpu.memory_space<vmem>>, vector<1x1x8x256xbf16>,
    return
  }
  func.func @transform_0(%arg0: i32) -> i32 {
    %c0_i32 = arith.constant 0 : i32
    %c0_i32_0 = arith.constant 0 : i32
    return %c0_i32 : i32
  }
  func.func @transform_1(%arg0: i32) -> (i32, i32, i32, i32) {
    %c0_i32 = arith.constant 0 : i32
    %c0_i32_0 = arith.constant 0 : i32
    %c0_i32_1 = arith.constant 0 : i32
    %c0_i32_2 = arith.constant 0 : i32
    return %arg0, %c0_i32, %c0_i32_0, %c0_i32_1 : i32, i32, i32, i32
  }
  func.func @transform_2(%arg0: i32) -> (i32, i32) {
    %c0_i32 = arith.constant 0 : i32
    %c0_i32_0 = arith.constant 0 : i32
    %c0_i32_1 = arith.constant 0 : i32
    return %c0_i32, %c0_i32_0 : i32, i32
  }
  func.func @transform_3(%arg0: i32) -> (i32, i32) {
    %c0_i32 = arith.constant 0 : i32
    %c0_i32_0 = arith.constant 0 : i32
    %c0_i32_1 = arith.constant 0 : i32
    return %c0_i32, %c0_i32_0 : i32, i32
  }
  func.func @transform_4(%arg0: i32) -> (i32, i32, i32, i32) {
    %c0_i32 = arith.constant 0 : i32
    %c0_i32_0 = arith.constant 0 : i32
    %c0_i32_1 = arith.constant 0 : i32
    %c0_i32_2 = arith.constant 0 : i32
    return %arg0, %c0_i32, %c0_i32_0, %c0_i32_1 : i32, i32, i32, i32
  }
}

</mosaic_0001>

<llo_original>
// kernel: tpu_custom_call.1
$region0: #{tpu_custom_call.1}
  #allocation0 [shape = 'u32[]', space=smem, size = 0x4, offset = 0x4, fixed_abs, tag = 'smem constant byte address 0x4 - core index']
  #allocation1 [shape = 'u32[144,128]{1,0:T(1,128)}', space=vmem, size = 0x12000, scoped, tag = 'internal scratch']
  #allocation2 [shape = 'f32[4,4,290]{2,1,0:T(4,128)}', space=vmem, size = 0x6000, scoped, tag = 'scratch operand']
  #allocation3 [shape = 'bf16[36,1024]{1,0:T(8,128)(2,1)}', space=vmem, size = 0x14000, scoped, tag = 'scratch operand']
  #allocation4 [shape = 'f32[8,1024]{1,0:T(8,128)}', space=vmem, size = 0x8000, scoped, tag = 'scratch operand']
  #allocation5 [shape = 'f32[1]{0:T(128)S(6)}', space=smem, size = 0x200, scoped, tag = 'scoped memory for tpu_custom_call.1']
  %s0 = inlined_call_operand.<no memory space> [shape: f32[1], index: 0, kind: input, shape index: {}]
  %s1 = inlined_call_operand.hbm [shape: f32[2,4,4,256], index: 1, kind: input, shape index: {}]
  %s2 = inlined_call_operand.vmem [shape: bf16[8,36], index: 2, kind: input, shape index: {}]
  %s3 = inlined_call_operand.vmem [shape: f32[8,1], index: 3, kind: input, shape index: {}]
  %s4 = inlined_call_operand.hbm [shape: bf16[2,4,8,256], index: 4, kind: output, shape index: {}]
  %s5 = sld [smem:[#allocation0]]
  $region53: #{tpu_custom_call.1} parent=0
    _
  %s7 = ssub.s32 1, %s5
  %s8 = scalar_select 0, %s7, %s5
  %9 = sst [smem:[#allocation5]] %s0
  $region1: #{tpu_custom_call.1} parent=0
    #allocation6 [shape = 'u8[32768]{0}', space=vmem, size = 0x8000, scoped, tag = 'input window, operand 1']
    #allocation7 [shape = 's32[2]{0}', space=sflag, size = 0x8, scoped, tag = 'scoped memory for tpu_custom_call.1']
    #allocation8 [shape = 's32[2]{0}', space=sflag, size = 0x8, scoped, tag = 'scoped memory for tpu_custom_call.1']
    #allocation9 [shape = 'u8[32768]{0}', space=vmem, size = 0x8000, scoped, tag = 'output window, operand 0']
    %10 = vsyncpa [#allocation7], 0
    %s11 = scalar_lea.sflag [#allocation7], 1
    %12 = vsyncpa %s11, 0
    %13 = vsyncpa [#allocation8], 0
    %s14 = scalar_lea.sflag [#allocation8], 1
    %15 = vsyncpa %s14, 0
    loop: start=0, step=1, limit=4
    $region2: #{tpu_custom_call.1} parent=1 // loop_pre_header
      _
    $region3: #{tpu_custom_call.1} parent=1 // loop_header
      %s17 = sphi 0, %s21
      %p18 = scmp.ge.s32.totalorder %s17, 4
      %s25 = sphi 0, %s25
      %s27 = sphi 0, %s25
      %s28 = sphi 0, %s27
      %s42 = sphi 0, %s28
      %s48 = sphi 0, %s50
      %s51 = sphi 0, %s48
      %s52 = sphi 0, %s51
      %s68 = sphi 0, %s52
      %s72 = sphi 0, %s72
      %s74 = sphi 0, %s72
      %s75 = sphi 0, %s74
      %s89 = sphi 0, %s75
      %s93 = sphi 0, %s93
      %s95 = sphi 0, %s93
      %s96 = sphi 0, %s95
      %s110 = sphi 0, %s96
      %s116 = sphi 0, %s118
      %s119 = sphi 0, %s116
      %s120 = sphi 0, %s119
      %s136 = sphi 0, %s120
    $region4: #{tpu_custom_call.1} parent=1 // loop_header_branch
      %20 = sbr.rel (%p18) target = $region8
    $region5: #{tpu_custom_call.1} parent=1 // loop_body
      %s22 = ssub.s32 %s17, 1
      %s23 = ssub.s32 %s17, 2
      %s24 = sadd.s32 %s17, 1
      %s26 = sadd.s32 %s25, 1
      %p29 = scmp.eq.s32.totalorder %s17, 1
      %p30 = scmp.ne.s32.totalorder %s25, %s27
      %p31 = scmp.eq.s32.totalorder %s17, 0
      %p32 = por %p30, %p31
      %p33 = scmp.ne.s32.totalorder %s25, %s27
      %p34 = scmp.eq.s32.totalorder %s22, 1
      %p35 = por %p33, %p34
      %p36 = scmp.ne.s32.totalorder %s27, %s28
      %p37 = scmp.eq.s32.totalorder %s22, 0
      %p38 = por %p36, %p37
      %p39 = scmp.ne.s32.totalorder %s27, %s28
      %p40 = scmp.eq.s32.totalorder %s23, 1
      %p41 = por %p39, %p40
      %p43 = scmp.ne.s32.totalorder %s28, %s42
      %p44 = scmp.eq.s32.totalorder %s23, 0
      %p45 = por %p43, %p44
      %s46 = ssub.s32 %s17, %s24
      %p47 = scmp.eq.s32.totalorder %s46, 0
      %s49 = sadd.s32 %s48, 1
      %s50 = scalar_select %p47, %s48, %s49
      %p53 = pneg %p47
      %p54 = scmp.eq.s32.totalorder %s17, 1
      %p55 = por %p53, %p54
      %p56 = scmp.ne.s32.totalorder %s48, %s51
      %p57 = scmp.eq.s32.totalorder %s17, 0
      %p58 = por %p56, %p57
      %p59 = scmp.ne.s32.totalorder %s48, %s51
      %p60 = scmp.eq.s32.totalorder %s22, 1
      %p61 = por %p59, %p60
      %p62 = scmp.ne.s32.totalorder %s51, %s52
      %p63 = scmp.eq.s32.totalorder %s22, 0
      %p64 = por %p62, %p63
      %p65 = scmp.ne.s32.totalorder %s51, %s52
      %p66 = scmp.eq.s32.totalorder %s23, 1
      %p67 = por %p65, %p66
      %p69 = scmp.ne.s32.totalorder %s52, %s68
      %p70 = scmp.eq.s32.totalorder %s23, 0
      %p71 = por %p69, %p70
      %s73 = sadd.s32 %s72, 1
      %p76 = scmp.eq.s32.totalorder %s17, 1
      %p77 = scmp.ne.s32.totalorder %s72, %s74
      %p78 = scmp.eq.s32.totalorder %s17, 0
      %p79 = por %p77, %p78
      %p80 = scmp.ne.s32.totalorder %s72, %s74
      %p81 = scmp.eq.s32.totalorder %s22, 1
      %p82 = por %p80, %p81
      %p83 = scmp.ne.s32.totalorder %s74, %s75
      %p84 = scmp.eq.s32.totalorder %s22, 0
      %p85 = por %p83, %p84
      %p86 = scmp.ne.s32.totalorder %s74, %s75
      %p87 = scmp.eq.s32.totalorder %s23, 1
      %p88 = por %p86, %p87
      %p90 = scmp.ne.s32.totalorder %s75, %s89
      %p91 = scmp.eq.s32.totalorder %s23, 0
      %p92 = por %p90, %p91
      %s94 = sadd.s32 %s93, 1
      %p97 = scmp.eq.s32.totalorder %s17, 1
      %p98 = scmp.ne.s32.totalorder %s93, %s95
      %p99 = scmp.eq.s32.totalorder %s17, 0
      %p100 = por %p98, %p99
      %p101 = scmp.ne.s32.totalorder %s93, %s95
      %p102 = scmp.eq.s32.totalorder %s22, 1
      %p103 = por %p101, %p102
      %p104 = scmp.ne.s32.totalorder %s95, %s96
      %p105 = scmp.eq.s32.totalorder %s22, 0
      %p106 = por %p104, %p105
      %p107 = scmp.ne.s32.totalorder %s95, %s96
      %p108 = scmp.eq.s32.totalorder %s23, 1
      %p109 = por %p107, %p108
      %p111 = scmp.ne.s32.totalorder %s96, %s110
      %p112 = scmp.eq.s32.totalorder %s23, 0
      %p113 = por %p111, %p112
      %s114 = ssub.s32 %s17, %s24
      %p115 = scmp.eq.s32.totalorder %s114, 0
      %s117 = sadd.s32 %s116, 1
      %s118 = scalar_select %p115, %s116, %s117
      %p121 = pneg %p115
      %p122 = scmp.eq.s32.totalorder %s17, 1
      %p123 = por %p121, %p122
      %p124 = scmp.ne.s32.totalorder %s116, %s119
      %p125 = scmp.eq.s32.totalorder %s17, 0
      %p126 = por %p124, %p125
      %p127 = scmp.ne.s32.totalorder %s116, %s119
      %p128 = scmp.eq.s32.totalorder %s22, 1
      %p129 = por %p127, %p128
      %p130 = scmp.ne.s32.totalorder %s119, %s120
      %p131 = scmp.eq.s32.totalorder %s22, 0
      %p132 = por %p130, %p131
      %p133 = scmp.ne.s32.totalorder %s119, %s120
      %p134 = scmp.eq.s32.totalorder %s23, 1
      %p135 = por %p133, %p134
      %p137 = scmp.ne.s32.totalorder %s120, %s136
      %p138 = scmp.eq.s32.totalorder %s23, 0
      %p139 = por %p137, %p138
      %p140 = scmp.le.s32.totalorder 1, %s17
      %p141 = scmp.lt.s32.totalorder %s17, 3
      %p142 = pnand %p140, %p141
      %p143 = pneg %p142
      // Predicated region
      $region9: #{tpu_custom_call.1} parent=5 // pred_check
        _
      $region10: #{tpu_custom_call.1} parent=5 // pred_check_branch
        %145 = sbr.rel (%p142) target = $region12
      $region11: #{tpu_custom_call.1} parent=5 // pred_region
        %s146 = ssub.s32 %s17, 1
        // Predicated region
        $region13: #{tpu_custom_call.1} parent=11 // pred_check
          %p147 = pneg %p38
        $region14: #{tpu_custom_call.1} parent=11 // pred_check_branch
          %149 = sbr.rel (%p147) target = $region16
        $region15: #{tpu_custom_call.1} parent=11 // pred_region
          _
        $region16: #{tpu_custom_call.1} parent=11 // pred_fallthru
          _
        // Predicated region
        $region17: #{tpu_custom_call.1} parent=11 // pred_check
          %p150 = pneg %p85
        $region18: #{tpu_custom_call.1} parent=11 // pred_check_branch
          %152 = sbr.rel (%p150) target = $region20
        $region19: #{tpu_custom_call.1} parent=11 // pred_region
          _
        $region20: #{tpu_custom_call.1} parent=11 // pred_fallthru
          _
        // Predicated region
        $region21: #{tpu_custom_call.1} parent=11 // pred_check
          %p153 = pneg %p106
        $region22: #{tpu_custom_call.1} parent=11 // pred_check_branch
          %155 = sbr.rel (%p153) target = $region24
        $region23: #{tpu_custom_call.1} parent=11 // pred_region
          _
        $region24: #{tpu_custom_call.1} parent=11 // pred_fallthru
          _
      $region12: #{tpu_custom_call.1} parent=5 // pred_fallthru
        _
      %p156 = scmp.lt.s32.totalorder %s17, 2
      // Predicated region
      $region25: #{tpu_custom_call.1} parent=5 // pred_check
        %p157 = pneg %p156
      $region26: #{tpu_custom_call.1} parent=5 // pred_check_branch
        %159 = sbr.rel (%p157) target = $region28
      $region27: #{tpu_custom_call.1} parent=5 // pred_region
        // Predicated region
        $region29: #{tpu_custom_call.1} parent=27 // pred_check
          %p160 = pneg %p58
        $region30: #{tpu_custom_call.1} parent=27 // pred_check_branch
          %162 = sbr.rel (%p160) target = $region32
        $region31: #{tpu_custom_call.1} parent=27 // pred_region
          %s163 = sand.u32 %s48, 1
          %s164 = scalar_lea.sflag [#allocation7], %s163
          %s165 = sand.u32 %s48, 1
          %s166 = smul.addr %s165, 32
          %s167 = scalar_lea.vmem [#allocation6], %s166
          %s169 = ssub.s32 512, 512
          %170 = vsyncadd %s164, %s169
          %s171 = smul.addr %s17, 8
          %s172 = smul.addr %s171, 64
          %s173 = scalar_lea.hbm %s1, %s172
          %s174 = sshll.u32 %s167, 4
          %s175 = int_to_ptr.vmem [resolvable:$true] %s174
          %180 = dma.hbm_to_vmem [thread:$0]  %s173, 512, %s175, %s164, 128, 128, 8
        $region32: #{tpu_custom_call.1} parent=27 // pred_fallthru
          _
      $region28: #{tpu_custom_call.1} parent=5 // pred_fallthru
        _
      %p181 = scmp.le.s32.totalorder 1, %s17
      %p182 = scmp.lt.s32.totalorder %s17, 3
      %p183 = pnand %p181, %p182
      %p184 = pneg %p183
      // Predicated region
      $region33: #{tpu_custom_call.1} parent=5 // pred_check
        _
      $region34: #{tpu_custom_call.1} parent=5 // pred_check_branch
        %186 = sbr.rel (%p183) target = $region36
      $region35: #{tpu_custom_call.1} parent=5 // pred_region
        %s187 = ssub.s32 %s17, 1
        %s188 = sand.u32 %s51, 1
        %s189 = scalar_lea.sflag [#allocation7], %s188
        %s190 = sand.u32 %s51, 1
        %s191 = smul.addr %s190, 32
        %s192 = scalar_lea.vmem [#allocation6], %s191
        // Predicated region
        $region37: #{tpu_custom_call.1} parent=35 // pred_check
          %p193 = pneg %p64
        $region38: #{tpu_custom_call.1} parent=35 // pred_check_branch
          %195 = sbr.rel (%p193) target = $region40
        $region39: #{tpu_custom_call.1} parent=35 // pred_region
          %196 = dma.done %s189, 512
        $region40: #{tpu_custom_call.1} parent=35 // pred_fallthru
          _
        %p197 = pneg %p38
        %p198 = pneg %p35
        %s199 = sand.u32 %s51, 1
        %s200 = scalar_lea.sflag [#allocation7], %s199
        %s201 = sand.u32 %s51, 1
        %s202 = smul.addr %s201, 32
        %s203 = scalar_lea.vmem [#allocation6], %s202
        %p204 = pneg %p64
        %p205 = pneg %p61
        %p206 = pneg %p85
        %p207 = pneg %p82
        %p208 = pneg %p106
        %p209 = pneg %p103
        %p210 = pneg %p132
        %p211 = pneg %p129
        %s212 = sand.u32 %s119, 1
        %s213 = scalar_lea.sflag [#allocation8], %s212
        %s214 = sand.u32 %s119, 1
        %s215 = smul.addr %s214, 32
        %s216 = scalar_lea.vmem [#allocation9], %s215
        %s218 = sld [smem:[#allocation5]]
        %vm219 = vcmask 134144
        %220 = vst.msk [vmem:[#allocation2] sm:$0xf] %vm219, 0.0
        %221 = vst.msk [vmem:[#allocation2 + $0xc] sm:$0xf] %vm219, 0.0
        %222 = vst.msk [vmem:[#allocation2 + $0x18] sm:$0xf] %vm219, 0.0
        %223 = vst.msk [vmem:[#allocation2 + $0x24] sm:$0xf] %vm219, 0.0
        %vm224 = vcmask 273544
        %225 = vst.msk [vmem:[#allocation2 + $0x8] sm:$0xf] %vm224, 0.0
        %226 = vst.msk [vmem:[#allocation2 + $0x14] sm:$0xf] %vm224, 0.0
        %227 = vst.msk [vmem:[#allocation2 + $0x20] sm:$0xf] %vm224, 0.0
        %228 = vst.msk [vmem:[#allocation2 + $0x2c] sm:$0xf] %vm224, 0.0
        %v229 = vld [vmem:[%s192] sm:$0xff]
        %v230 = vld [vmem:[%s192 + $0x8] sm:$0xff]
        %v231 = vld [vmem:[%s192 + $0x10] sm:$0xff]
        %v232 = vld [vmem:[%s192 + $0x18] sm:$0xff]
        %237 = vrot.lane.b32.xlu0 %v229, 17
        %v238 = vpop.permute.xlu0 %237
        %239 = vrot.lane.b32.xlu0 %v230, 17
        %v240 = vpop.permute.xlu0 %239
        %241 = vrot.lane.b32.xlu0 %v231, 17
        %v242 = vpop.permute.xlu0 %241
        %243 = vrot.lane.b32.xlu0 %v232, 17
        %v244 = vpop.permute.xlu0 %243
        %v245 = vrot.slane %v238, 4
        %v246 = vrot.slane %v240, 4
        %v247 = vrot.slane %v242, 4
        %v248 = vrot.slane %v244, 4
        %vm249 = vcmask 138240
        %v250 = vsel %vm249, %v245, %v238
        %v251 = vsel %vm249, %v246, %v240
        %v252 = vsel %vm249, %v247, %v242
        %v253 = vsel %vm249, %v248, %v244
        %vm262 = vcmask 1043592
        %vm263 = vcmask 1047556
        %vm264 = vmor %vm263, %vm262
        %265 = vst.msk [vmem:[#allocation2] sm:$0xff] %vm264, %v250
        %266 = vst.msk [vmem:[#allocation2 + $0x8] sm:$0xf] %vm219, %v245
        %267 = vst.msk [vmem:[#allocation2 + $0xc] sm:$0xff] %vm264, %v251
        %268 = vst.msk [vmem:[#allocation2 + $0x14] sm:$0xf] %vm219, %v246
        %269 = vst.msk [vmem:[#allocation2 + $0x18] sm:$0xff] %vm264, %v252
        %270 = vst.msk [vmem:[#allocation2 + $0x20] sm:$0xf] %vm219, %v247
        %271 = vst.msk [vmem:[#allocation2 + $0x24] sm:$0xff] %vm264, %v253
        %272 = vst.msk [vmem:[#allocation2 + $0x2c] sm:$0xf] %vm219, %v248
        %v273 = vlaneseq
        %v274 = vand.u32 %v273, 127
        %v275 = vadd.s32 %v274, 128
        %vm276 = vcmp.lt.s32.totalorder %v274, 0
        %v277 = vsub.s32 0, %v274
        %v278 = vsel %vm276, %v277, %v274
        %v279 = vshrl.u32 %v278, 4
        %v280 = vand.u32 %v278, 15
        %v281 = vsub.s32 0, %v280
        %v282 = vsel %vm276, %v281, %v280
        %vm283 = vcmp.lt.s32.totalorder %v275, 0
        %v284 = vsub.s32 0, %v275
        %v285 = vsel %vm283, %v284, %v275
        %v286 = vshrl.u32 %v285, 4
        %v287 = vand.u32 %v285, 15
        %v288 = vsub.s32 0, %v287
        %v289 = vsel %vm283, %v288, %v287
        %vm290 = vcmp.ne.s32.totalorder %v282, 0
        %vm291 = vcmp.ne.s32.totalorder %v289, 0
        %vm292 = vcmp.lt.s32.totalorder %v282, 0
        %vm293 = vcmp.lt.s32.totalorder %v289, 0
        %vm294 = vmand %vm292, %vm290
        %vm295 = vmand %vm293, %vm291
        %v296 = vadd.s32 %v282, 16
        %v297 = vadd.s32 %v289, 16
        %v298 = vsel %vm294, %v296, %v282
        %v299 = vsel %vm295, %v297, %v289
        %vm300 = vcmp.ge.s32.totalorder %v298, 1
        %vm301 = vcmp.ge.s32.totalorder %v299, 1
        %vm302 = vcmp.lt.s32.totalorder %v298, 15
        %vm303 = vcmp.lt.s32.totalorder %v299, 15
        %v304 = vld [vmem:[#allocation2] sm:$0xff]
        %v305 = vld [vmem:[#allocation2 + $0xc] sm:$0xff]
        %v306 = vld [vmem:[#allocation2 + $0x18] sm:$0xff]
        %v307 = vld [vmem:[#allocation2 + $0x24] sm:$0xff]
        %v308 = vsel %vm300, 1, 0
        %v309 = vsel %vm301, 1, 0
        %vm310 = vcmp.eq.s32.totalorder %v308, 1
        %vm311 = vcmp.eq.s32.totalorder %v309, 1
        %v316 = vcombine.high %v304, %v304
        %v317 = vcombine.high %v305, %v305
        %v318 = vcombine.high %v306, %v306
        %v319 = vcombine.high %v307, %v307
        %v324 = vsel %vm310, %v304, 0.0
        %v325 = vsel %vm311, %v316, 0.0
        %v326 = vsel %vm310, %v305, 0.0
        %v327 = vsel %vm311, %v317, 0.0
        %v328 = vsel %vm310, %v306, 0.0
        %v329 = vsel %vm311, %v318, 0.0
        %v330 = vsel %vm310, %v307, 0.0
        %v331 = vsel %vm311, %v319, 0.0
        %v332 = vpack.c.bf16 %v324, %v324
        %v333 = vpack.c.bf16 %v325, %v325
        %v334 = vpack.c.bf16 %v326, %v326
        %v335 = vpack.c.bf16 %v327, %v327
        %v336 = vpack.c.bf16 %v328, %v328
        %v337 = vpack.c.bf16 %v329, %v329
        %v338 = vpack.c.bf16 %v330, %v330
        %v339 = vpack.c.bf16 %v331, %v331
        %v342 = vunpack.c.l.b16 %v332
        %v343 = vunpack.c.l.b16 %v333
        %v344 = vpack.c.b16 %v343, %v342
        %346 = vst [vmem:[#allocation3] sm:$0x33] %v344
        %v349 = vunpack.c.l.b16 %v334
        %v350 = vunpack.c.l.b16 %v335
        %v351 = vpack.c.b16 %v350, %v349
        %353 = vst [vmem:[#allocation3 + $0x8] sm:$0x33] %v351
        %v356 = vunpack.c.l.b16 %v336
        %v357 = vunpack.c.l.b16 %v337
        %v358 = vpack.c.b16 %v357, %v356
        %360 = vst [vmem:[#allocation3 + $0x10] sm:$0x33] %v358
        %v363 = vunpack.c.l.b16 %v338
        %v364 = vunpack.c.l.b16 %v339
        %v365 = vpack.c.b16 %v364, %v363
        %367 = vst [vmem:[#allocation3 + $0x18] sm:$0x33] %v365
        %v368 = vld [vmem:[#allocation2] sm:$0xff]
        %v369 = vld [vmem:[#allocation2 + $0x8] sm:$0xf]
        %v370 = vld [vmem:[#allocation2 + $0xc] sm:$0xff]
        %v371 = vld [vmem:[#allocation2 + $0x14] sm:$0xf]
        %v372 = vld [vmem:[#allocation2 + $0x18] sm:$0xff]
        %v373 = vld [vmem:[#allocation2 + $0x20] sm:$0xf]
        %v374 = vld [vmem:[#allocation2 + $0x24] sm:$0xff]
        %v375 = vld [vmem:[#allocation2 + $0x2c] sm:$0xf]
        %v380 = vcombine.high %v368, %v368
        %v381 = vcombine.high %v370, %v370
        %v382 = vcombine.high %v372, %v372
        %v383 = vcombine.high %v374, %v374
        %v388 = vpack.c.bf16 %v368, %v368
        %v389 = vpack.c.bf16 %v380, %v380
        %v390 = vpack.c.bf16 %v369, %v369
        %v391 = vpack.c.bf16 %v370, %v370
        %v392 = vpack.c.bf16 %v381, %v381
        %v393 = vpack.c.bf16 %v371, %v371
        %v394 = vpack.c.bf16 %v372, %v372
        %v395 = vpack.c.bf16 %v382, %v382
        %v396 = vpack.c.bf16 %v373, %v373
        %v397 = vpack.c.bf16 %v374, %v374
        %v398 = vpack.c.bf16 %v383, %v383
        %v399 = vpack.c.bf16 %v375, %v375
        %v403 = vunpack.c.l.b16 %v388
        %v404 = vunpack.c.l.b16 %v389
        %v405 = vunpack.c.l.b16 %v390
        %v406 = vpack.c.b16 %v404, %v403
        %v407 = vpack.c.b16 %v405, %v405
        %v408 = vrot.slane %v406, 6
        %v409 = vrot.slane %v407, 6
        %410 = vrot.lane.b32.xlu0 %v408, 127
        %v411 = vpop.permute.xlu0 %410
        %412 = vrot.lane.b32.xlu0 %v409, 127
        %v413 = vpop.permute.xlu0 %412
        %v414 = vrot.slane %v411, 4
        %v415 = vrot.slane %v413, 4
        %vm416 = vcmask 1043456
        %v417 = vsel %vm416, %v414, %v415
        %vm418 = vcmask 1039360
        %v419 = vsel %vm418, %v411, %v417
        %421 = vst [vmem:[#allocation3] sm:$0xcc] %v419
        %v425 = vunpack.c.l.b16 %v391
        %v426 = vunpack.c.l.b16 %v392
        %v427 = vunpack.c.l.b16 %v393
        %v428 = vpack.c.b16 %v426, %v425
        %v429 = vpack.c.b16 %v427, %v427
        %v430 = vrot.slane %v428, 6
        %v431 = vrot.slane %v429, 6
        %432 = vrot.lane.b32.xlu0 %v430, 127
        %v433 = vpop.permute.xlu0 %432
        %434 = vrot.lane.b32.xlu0 %v431, 127
        %v435 = vpop.permute.xlu0 %434
        %v436 = vrot.slane %v433, 4
        %v437 = vrot.slane %v435, 4
        %v438 = vsel %vm416, %v436, %v437
        %v439 = vsel %vm418, %v433, %v438
        %441 = vst [vmem:[#allocation3 + $0x8] sm:$0xcc] %v439
        %v445 = vunpack.c.l.b16 %v394
        %v446 = vunpack.c.l.b16 %v395
        %v447 = vunpack.c.l.b16 %v396
        %v448 = vpack.c.b16 %v446, %v445
        %v449 = vpack.c.b16 %v447, %v447
        %v450 = vrot.slane %v448, 6
        %v451 = vrot.slane %v449, 6
        %452 = vrot.lane.b32.xlu0 %v450, 127
        %v453 = vpop.permute.xlu0 %452
        %454 = vrot.lane.b32.xlu0 %v451, 127
        %v455 = vpop.permute.xlu0 %454
        %v456 = vrot.slane %v453, 4
        %v457 = vrot.slane %v455, 4
        %v458 = vsel %vm416, %v456, %v457
        %v459 = vsel %vm418, %v453, %v458
        %461 = vst [vmem:[#allocation3 + $0x10] sm:$0xcc] %v459
        %v465 = vunpack.c.l.b16 %v397
        %v466 = vunpack.c.l.b16 %v398
        %v467 = vunpack.c.l.b16 %v399
        %v468 = vpack.c.b16 %v466, %v465
        %v469 = vpack.c.b16 %v467, %v467
        %v470 = vrot.slane %v468, 6
        %v471 = vrot.slane %v469, 6
        %472 = vrot.lane.b32.xlu0 %v470, 127
        %v473 = vpop.permute.xlu0 %472
        %474 = vrot.lane.b32.xlu0 %v471, 127
        %v475 = vpop.permute.xlu0 %474
        %v476 = vrot.slane %v473, 4
        %v477 = vrot.slane %v475, 4
        %v478 = vsel %vm416, %v476, %v477
        %v479 = vsel %vm418, %v473, %v478
        %481 = vst [vmem:[#allocation3 + $0x18] sm:$0xcc] %v479
        %v482 = vld [vmem:[#allocation2] sm:$0xff]
        %v483 = vld [vmem:[#allocation2 + $0x8] sm:$0xf]
        %v484 = vld [vmem:[#allocation2 + $0xc] sm:$0xff]
        %v485 = vld [vmem:[#allocation2 + $0x14] sm:$0xf]
        %v486 = vld [vmem:[#allocation2 + $0x18] sm:$0xff]
        %v487 = vld [vmem:[#allocation2 + $0x20] sm:$0xf]
        %v488 = vld [vmem:[#allocation2 + $0x24] sm:$0xff]
        %v489 = vld [vmem:[#allocation2 + $0x2c] sm:$0xf]
        %v490 = vsel %vm302, 1, 0
        %v491 = vsel %vm303, 1, 0
        %vm492 = vcmp.eq.s32.totalorder %v490, 1
        %vm493 = vcmp.eq.s32.totalorder %v491, 1
        %v502 = vcombine.high %v482, %v482
        %v503 = vcombine.high %v484, %v484
        %v504 = vcombine.high %v486, %v486
        %v505 = vcombine.high %v488, %v488
        %506 = vrot.lane.b32.xlu0 %v482, 126
        %v507 = vpop.permute.xlu0 %506
        %508 = vrot.lane.b32.xlu0 %v502, 126
        %v509 = vpop.permute.xlu0 %508
        %510 = vrot.lane.b32.xlu0 %v483, 126
        %v511 = vpop.permute.xlu0 %510
        %512 = vrot.lane.b32.xlu0 %v484, 126
        %v513 = vpop.permute.xlu0 %512
        %514 = vrot.lane.b32.xlu0 %v503, 126
        %v515 = vpop.permute.xlu0 %514
        %516 = vrot.lane.b32.xlu0 %v485, 126
        %v517 = vpop.permute.xlu0 %516
        %518 = vrot.lane.b32.xlu0 %v486, 126
        %v519 = vpop.permute.xlu0 %518
        %520 = vrot.lane.b32.xlu0 %v504, 126
        %v521 = vpop.permute.xlu0 %520
        %522 = vrot.lane.b32.xlu0 %v487, 126
        %v523 = vpop.permute.xlu0 %522
        %524 = vrot.lane.b32.xlu0 %v488, 126
        %v525 = vpop.permute.xlu0 %524
        %526 = vrot.lane.b32.xlu0 %v505, 126
        %v527 = vpop.permute.xlu0 %526
        %528 = vrot.lane.b32.xlu0 %v489, 126
        %v529 = vpop.permute.xlu0 %528
        %vm530 = vcmask 1031168
        %v531 = vsel %vm530, %v507, %v509
        %v532 = vsel %vm530, %v509, %v511
        %v533 = vsel %vm530, %v513, %v515
        %v534 = vsel %vm530, %v515, %v517
        %v535 = vsel %vm530, %v519, %v521
        %v536 = vsel %vm530, %v521, %v523
        %v537 = vsel %vm530, %v525, %v527
        %v538 = vsel %vm530, %v527, %v529
        %v547 = vsel %vm492, %v531, 0.0
        %v548 = vsel %vm493, %v532, 0.0
        %v549 = vsel %vm492, %v533, 0.0
        %v550 = vsel %vm493, %v534, 0.0
        %v551 = vsel %vm492, %v535, 0.0
        %v552 = vsel %vm493, %v536, 0.0
        %v553 = vsel %vm492, %v537, 0.0
        %v554 = vsel %vm493, %v538, 0.0
        %v555 = vpack.c.bf16 %v547, %v547
        %v556 = vpack.c.bf16 %v548, %v548
        %v557 = vpack.c.bf16 %v549, %v549
        %v558 = vpack.c.bf16 %v550, %v550
        %v559 = vpack.c.bf16 %v551, %v551
        %v560 = vpack.c.bf16 %v552, %v552
        %v561 = vpack.c.bf16 %v553, %v553
        %v562 = vpack.c.bf16 %v554, %v554
        %v565 = vunpack.c.l.b16 %v555
        %v566 = vunpack.c.l.b16 %v556
        %v567 = vpack.c.b16 %v566, %v565
        %569 = vst [vmem:[#allocation3 + $0x20] sm:$0x33] %v567
        %v572 = vunpack.c.l.b16 %v557
        %v573 = vunpack.c.l.b16 %v558
        %v574 = vpack.c.b16 %v573, %v572
        %576 = vst [vmem:[#allocation3 + $0x28] sm:$0x33] %v574
        %v579 = vunpack.c.l.b16 %v559
        %v580 = vunpack.c.l.b16 %v560
        %v581 = vpack.c.b16 %v580, %v579
        %583 = vst [vmem:[#allocation3 + $0x30] sm:$0x33] %v581
        %v586 = vunpack.c.l.b16 %v561
        %v587 = vunpack.c.l.b16 %v562
        %v588 = vpack.c.b16 %v587, %v586
        %590 = vst [vmem:[#allocation3 + $0x38] sm:$0x33] %v588
        %v591 = vld [vmem:[#allocation2] sm:$0xff]
        %v592 = vld [vmem:[#allocation2 + $0x8] sm:$0xf]
        %v593 = vld [vmem:[#allocation2 + $0xc] sm:$0xff]
        %v594 = vld [vmem:[#allocation2 + $0x14] sm:$0xf]
        %v595 = vld [vmem:[#allocation2 + $0x18] sm:$0xff]
        %v596 = vld [vmem:[#allocation2 + $0x20] sm:$0xf]
        %v597 = vld [vmem:[#allocation2 + $0x24] sm:$0xff]
        %v598 = vld [vmem:[#allocation2 + $0x2c] sm:$0xf]
        %v607 = vcombine.high %v591, %v591
        %v608 = vcombine.high %v593, %v593
        %v609 = vcombine.high %v595, %v595
        %v610 = vcombine.high %v597, %v597
        %611 = vrot.lane.b32.xlu0 %v591, 112
        %v612 = vpop.permute.xlu0 %611
        %613 = vrot.lane.b32.xlu0 %v607, 112
        %v614 = vpop.permute.xlu0 %613
        %615 = vrot.lane.b32.xlu0 %v592, 112
        %v616 = vpop.permute.xlu0 %615
        %617 = vrot.lane.b32.xlu0 %v593, 112
        %v618 = vpop.permute.xlu0 %617
        %619 = vrot.lane.b32.xlu0 %v608, 112
        %v620 = vpop.permute.xlu0 %619
        %621 = vrot.lane.b32.xlu0 %v594, 112
        %v622 = vpop.permute.xlu0 %621
        %623 = vrot.lane.b32.xlu0 %v595, 112
        %v624 = vpop.permute.xlu0 %623
        %625 = vrot.lane.b32.xlu0 %v609, 112
        %v626 = vpop.permute.xlu0 %625
        %627 = vrot.lane.b32.xlu0 %v596, 112
        %v628 = vpop.permute.xlu0 %627
        %629 = vrot.lane.b32.xlu0 %v597, 112
        %v630 = vpop.permute.xlu0 %629
        %631 = vrot.lane.b32.xlu0 %v610, 112
        %v632 = vpop.permute.xlu0 %631
        %633 = vrot.lane.b32.xlu0 %v598, 112
        %v634 = vpop.permute.xlu0 %633
        %vm635 = vcmask 916480
        %v636 = vsel %vm635, %v612, %v614
        %v637 = vsel %vm635, %v614, %v616
        %v638 = vsel %vm635, %v618, %v620
        %v639 = vsel %vm635, %v620, %v622
        %v640 = vsel %vm635, %v624, %v626
        %v641 = vsel %vm635, %v626, %v628
        %v642 = vsel %vm635, %v630, %v632
        %v643 = vsel %vm635, %v632, %v634
        %v652 = vsel %vm310, %v636, 0.0
        %v653 = vsel %vm311, %v637, 0.0
        %v654 = vsel %vm310, %v638, 0.0
        %v655 = vsel %vm311, %v639, 0.0
        %v656 = vsel %vm310, %v640, 0.0
        %v657 = vsel %vm311, %v641, 0.0
        %v658 = vsel %vm310, %v642, 0.0
        %v659 = vsel %vm311, %v643, 0.0
        %v660 = vpack.c.bf16 %v652, %v652
        %v661 = vpack.c.bf16 %v653, %v653
        %v662 = vpack.c.bf16 %v654, %v654
        %v663 = vpack.c.bf16 %v655, %v655
        %v664 = vpack.c.bf16 %v656, %v656
        %v665 = vpack.c.bf16 %v657, %v657
        %v666 = vpack.c.bf16 %v658, %v658
        %v667 = vpack.c.bf16 %v659, %v659
        %v670 = vunpack.c.l.b16 %v660
        %v671 = vunpack.c.l.b16 %v661
        %v672 = vpack.c.b16 %v671, %v670
        %v673 = vrot.slane %v672, 6
        %675 = vst [vmem:[#allocation3 + $0x20] sm:$0xcc] %v673
        %v678 = vunpack.c.l.b16 %v662
        %v679 = vunpack.c.l.b16 %v663
        %v680 = vpack.c.b16 %v679, %v678
        %v681 = vrot.slane %v680, 6
        %683 = vst [vmem:[#allocation3 + $0x28] sm:$0xcc] %v681
        %v686 = vunpack.c.l.b16 %v664
        %v687 = vunpack.c.l.b16 %v665
        %v688 = vpack.c.b16 %v687, %v686
        %v689 = vrot.slane %v688, 6
        %691 = vst [vmem:[#allocation3 + $0x30] sm:$0xcc] %v689
        %v694 = vunpack.c.l.b16 %v666
        %v695 = vunpack.c.l.b16 %v667
        %v696 = vpack.c.b16 %v695, %v694
        %v697 = vrot.slane %v696, 6
        %699 = vst [vmem:[#allocation3 + $0x38] sm:$0xcc] %v697
        %v700 = vld [vmem:[#allocation2] sm:$0xff]
        %v701 = vld [vmem:[#allocation2 + $0x8] sm:$0xf]
        %v702 = vld [vmem:[#allocation2 + $0xc] sm:$0xff]
        %v703 = vld [vmem:[#allocation2 + $0x14] sm:$0xf]
        %v704 = vld [vmem:[#allocation2 + $0x18] sm:$0xff]
        %v705 = vld [vmem:[#allocation2 + $0x20] sm:$0xf]
        %v706 = vld [vmem:[#allocation2 + $0x24] sm:$0xff]
        %v707 = vld [vmem:[#allocation2 + $0x2c] sm:$0xf]
        %v712 = vcombine.high %v700, %v700
        %v713 = vcombine.high %v702, %v702
        %v714 = vcombine.high %v704, %v704
        %v715 = vcombine.high %v706, %v706
        %v720 = vpack.c.bf16 %v700, %v700
        %v721 = vpack.c.bf16 %v712, %v712
        %v722 = vpack.c.bf16 %v701, %v701
        %v723 = vpack.c.bf16 %v702, %v702
        %v724 = vpack.c.bf16 %v713, %v713
        %v725 = vpack.c.bf16 %v703, %v703
        %v726 = vpack.c.bf16 %v704, %v704
        %v727 = vpack.c.bf16 %v714, %v714
        %v728 = vpack.c.bf16 %v705, %v705
        %v729 = vpack.c.bf16 %v706, %v706
        %v730 = vpack.c.bf16 %v715, %v715
        %v731 = vpack.c.bf16 %v707, %v707
        %v735 = vunpack.c.l.b16 %v720
        %v736 = vunpack.c.l.b16 %v721
        %v737 = vunpack.c.l.b16 %v722
        %v738 = vpack.c.b16 %v736, %v735
        %v739 = vpack.c.b16 %v737, %v737
        %740 = vrot.lane.b32.xlu0 %v738, 111
        %v741 = vpop.permute.xlu0 %740
        %742 = vrot.lane.b32.xlu0 %v739, 111
        %v743 = vpop.permute.xlu0 %742
        %v744 = vrot.slane %v741, 4
        %v745 = vrot.slane %v743, 4
        %v746 = vsel %vm416, %v744, %v745
        %vm747 = vcmask 908288
        %v748 = vsel %vm747, %v741, %v746
        %750 = vst [vmem:[#allocation3 + $0x40] sm:$0x33] %v748
        %v754 = vunpack.c.l.b16 %v723
        %v755 = vunpack.c.l.b16 %v724
        %v756 = vunpack.c.l.b16 %v725
        %v757 = vpack.c.b16 %v755, %v754
        %v758 = vpack.c.b16 %v756, %v756
        %759 = vrot.lane.b32.xlu0 %v757, 111
        %v760 = vpop.permute.xlu0 %759
        %761 = vrot.lane.b32.xlu0 %v758, 111
        %v762 = vpop.permute.xlu0 %761
        %v763 = vrot.slane %v760, 4
        %v764 = vrot.slane %v762, 4
        %v765 = vsel %vm416, %v763, %v764
        %v766 = vsel %vm747, %v760, %v765
        %768 = vst [vmem:[#allocation3 + $0x48] sm:$0x33] %v766
        %v772 = vunpack.c.l.b16 %v726
        %v773 = vunpack.c.l.b16 %v727
        %v774 = vunpack.c.l.b16 %v728
        %v775 = vpack.c.b16 %v773, %v772
        %v776 = vpack.c.b16 %v774, %v774
        %777 = vrot.lane.b32.xlu0 %v775, 111
        %v778 = vpop.permute.xlu0 %777
        %779 = vrot.lane.b32.xlu0 %v776, 111
        %v780 = vpop.permute.xlu0 %779
        %v781 = vrot.slane %v778, 4
        %v782 = vrot.slane %v780, 4
        %v783 = vsel %vm416, %v781, %v782
        %v784 = vsel %vm747, %v778, %v783
        %786 = vst [vmem:[#allocation3 + $0x50] sm:$0x33] %v784
        %v790 = vunpack.c.l.b16 %v729
        %v791 = vunpack.c.l.b16 %v730
        %v792 = vunpack.c.l.b16 %v731
        %v793 = vpack.c.b16 %v791, %v790
        %v794 = vpack.c.b16 %v792, %v792
        %795 = vrot.lane.b32.xlu0 %v793, 111
        %v796 = vpop.permute.xlu0 %795
        %797 = vrot.lane.b32.xlu0 %v794, 111
        %v798 = vpop.permute.xlu0 %797
        %v799 = vrot.slane %v796, 4
        %v800 = vrot.slane %v798, 4
        %v801 = vsel %vm416, %v799, %v800
        %v802 = vsel %vm747, %v796, %v801
        %804 = vst [vmem:[#allocation3 + $0x58] sm:$0x33] %v802
        %v805 = vld [vmem:[#allocation2] sm:$0xff]
        %v806 = vld [vmem:[#allocation2 + $0x8] sm:$0xf]
        %v807 = vld [vmem:[#allocation2 + $0xc] sm:$0xff]
        %v808 = vld [vmem:[#allocation2 + $0x14] sm:$0xf]
        %v809 = vld [vmem:[#allocation2 + $0x18] sm:$0xff]
        %v810 = vld [vmem:[#allocation2 + $0x20] sm:$0xf]
        %v811 = vld [vmem:[#allocation2 + $0x24] sm:$0xff]
        %v812 = vld [vmem:[#allocation2 + $0x2c] sm:$0xf]
        %v821 = vcombine.high %v805, %v805
        %v822 = vcombine.high %v807, %v807
        %v823 = vcombine.high %v809, %v809
        %v824 = vcombine.high %v811, %v811
        %825 = vrot.lane.b32.xlu0 %v805, 110
        %v826 = vpop.permute.xlu0 %825
        %827 = vrot.lane.b32.xlu0 %v821, 110
        %v828 = vpop.permute.xlu0 %827
        %829 = vrot.lane.b32.xlu0 %v806, 110
        %v830 = vpop.permute.xlu0 %829
        %831 = vrot.lane.b32.xlu0 %v807, 110
        %v832 = vpop.permute.xlu0 %831
        %833 = vrot.lane.b32.xlu0 %v822, 110
        %v834 = vpop.permute.xlu0 %833
        %835 = vrot.lane.b32.xlu0 %v808, 110
        %v836 = vpop.permute.xlu0 %835
        %837 = vrot.lane.b32.xlu0 %v809, 110
        %v838 = vpop.permute.xlu0 %837
        %839 = vrot.lane.b32.xlu0 %v823, 110
        %v840 = vpop.permute.xlu0 %839
        %841 = vrot.lane.b32.xlu0 %v810, 110
        %v842 = vpop.permute.xlu0 %841
        %843 = vrot.lane.b32.xlu0 %v811, 110
        %v844 = vpop.permute.xlu0 %843
        %845 = vrot.lane.b32.xlu0 %v824, 110
        %v846 = vpop.permute.xlu0 %845
        %847 = vrot.lane.b32.xlu0 %v812, 110
        %v848 = vpop.permute.xlu0 %847
        %vm849 = vcmask 900096
        %v850 = vsel %vm849, %v826, %v828
        %v851 = vsel %vm849, %v828, %v830
        %v852 = vsel %vm849, %v832, %v834
        %v853 = vsel %vm849, %v834, %v836
        %v854 = vsel %vm849, %v838, %v840
        %v855 = vsel %vm849, %v840, %v842
        %v856 = vsel %vm849, %v844, %v846
        %v857 = vsel %vm849, %v846, %v848
        %v866 = vsel %vm492, %v850, 0.0
        %v867 = vsel %vm493, %v851, 0.0
        %v868 = vsel %vm492, %v852, 0.0
        %v869 = vsel %vm493, %v853, 0.0
        %v870 = vsel %vm492, %v854, 0.0
        %v871 = vsel %vm493, %v855, 0.0
        %v872 = vsel %vm492, %v856, 0.0
        %v873 = vsel %vm493, %v857, 0.0
        %v874 = vpack.c.bf16 %v866, %v866
        %v875 = vpack.c.bf16 %v867, %v867
        %v876 = vpack.c.bf16 %v868, %v868
        %v877 = vpack.c.bf16 %v869, %v869
        %v878 = vpack.c.bf16 %v870, %v870
        %v879 = vpack.c.bf16 %v871, %v871
        %v880 = vpack.c.bf16 %v872, %v872
        %v881 = vpack.c.bf16 %v873, %v873
        %v884 = vunpack.c.l.b16 %v874
        %v885 = vunpack.c.l.b16 %v875
        %v886 = vpack.c.b16 %v885, %v884
        %v887 = vrot.slane %v886, 6
        %889 = vst [vmem:[#allocation3 + $0x40] sm:$0xcc] %v887
        %v892 = vunpack.c.l.b16 %v876
        %v893 = vunpack.c.l.b16 %v877
        %v894 = vpack.c.b16 %v893, %v892
        %v895 = vrot.slane %v894, 6
        %897 = vst [vmem:[#allocation3 + $0x48] sm:$0xcc] %v895
        %v900 = vunpack.c.l.b16 %v878
        %v901 = vunpack.c.l.b16 %v879
        %v902 = vpack.c.b16 %v901, %v900
        %v903 = vrot.slane %v902, 6
        %905 = vst [vmem:[#allocation3 + $0x50] sm:$0xcc] %v903
        %v908 = vunpack.c.l.b16 %v880
        %v909 = vunpack.c.l.b16 %v881
        %v910 = vpack.c.b16 %v909, %v908
        %v911 = vrot.slane %v910, 6
        %913 = vst [vmem:[#allocation3 + $0x58] sm:$0xcc] %v911
        %v914 = vld [vmem:[#allocation2] sm:$0xff]
        %v915 = vld [vmem:[#allocation2 + $0x8] sm:$0xf]
        %v916 = vld [vmem:[#allocation2 + $0xc] sm:$0xff]
        %v917 = vld [vmem:[#allocation2 + $0x14] sm:$0xf]
        %v918 = vld [vmem:[#allocation2 + $0x18] sm:$0xff]
        %v919 = vld [vmem:[#allocation2 + $0x20] sm:$0xf]
        %v920 = vld [vmem:[#allocation2 + $0x24] sm:$0xff]
        %v921 = vld [vmem:[#allocation2 + $0x2c] sm:$0xf]
        %v930 = vcombine.high %v914, %v914
        %v931 = vcombine.high %v916, %v916
        %v932 = vcombine.high %v918, %v918
        %v933 = vcombine.high %v920, %v920
        %934 = vrot.lane.b32.xlu0 %v914, 96
        %v935 = vpop.permute.xlu0 %934
        %936 = vrot.lane.b32.xlu0 %v930, 96
        %v937 = vpop.permute.xlu0 %936
        %938 = vrot.lane.b32.xlu0 %v915, 96
        %v939 = vpop.permute.xlu0 %938
        %940 = vrot.lane.b32.xlu0 %v916, 96
        %v941 = vpop.permute.xlu0 %940
        %942 = vrot.lane.b32.xlu0 %v931, 96
        %v943 = vpop.permute.xlu0 %942
        %944 = vrot.lane.b32.xlu0 %v917, 96
        %v945 = vpop.permute.xlu0 %944
        %946 = vrot.lane.b32.xlu0 %v918, 96
        %v947 = vpop.permute.xlu0 %946
        %948 = vrot.lane.b32.xlu0 %v932, 96
        %v949 = vpop.permute.xlu0 %948
        %950 = vrot.lane.b32.xlu0 %v919, 96
        %v951 = vpop.permute.xlu0 %950
        %952 = vrot.lane.b32.xlu0 %v920, 96
        %v953 = vpop.permute.xlu0 %952
        %954 = vrot.lane.b32.xlu0 %v933, 96
        %v955 = vpop.permute.xlu0 %954
        %956 = vrot.lane.b32.xlu0 %v921, 96
        %v957 = vpop.permute.xlu0 %956
        %vm958 = vcmask 785408
        %v959 = vsel %vm958, %v935, %v937
        %v960 = vsel %vm958, %v937, %v939
        %v961 = vsel %vm958, %v941, %v943
        %v962 = vsel %vm958, %v943, %v945
        %v963 = vsel %vm958, %v947, %v949
        %v964 = vsel %vm958, %v949, %v951
        %v965 = vsel %vm958, %v953, %v955
        %v966 = vsel %vm958, %v955, %v957
        %v975 = vsel %vm310, %v959, 0.0
        %v976 = vsel %vm311, %v960, 0.0
        %v977 = vsel %vm310, %v961, 0.0
        %v978 = vsel %vm311, %v962, 0.0
        %v979 = vsel %vm310, %v963, 0.0
        %v980 = vsel %vm311, %v964, 0.0
        %v981 = vsel %vm310, %v965, 0.0
        %v982 = vsel %vm311, %v966, 0.0
        %v983 = vpack.c.bf16 %v975, %v975
        %v984 = vpack.c.bf16 %v976, %v976
        %v985 = vpack.c.bf16 %v977, %v977
        %v986 = vpack.c.bf16 %v978, %v978
        %v987 = vpack.c.bf16 %v979, %v979
        %v988 = vpack.c.bf16 %v980, %v980
        %v989 = vpack.c.bf16 %v981, %v981
        %v990 = vpack.c.bf16 %v982, %v982
        %v993 = vunpack.c.l.b16 %v983
        %v994 = vunpack.c.l.b16 %v984
        %v995 = vpack.c.b16 %v994, %v993
        %997 = vst [vmem:[#allocation3 + $0x60] sm:$0x33] %v995
        %v1000 = vunpack.c.l.b16 %v985
        %v1001 = vunpack.c.l.b16 %v986
        %v1002 = vpack.c.b16 %v1001, %v1000
        %1004 = vst [vmem:[#allocation3 + $0x68] sm:$0x33] %v1002
        %v1007 = vunpack.c.l.b16 %v987
        %v1008 = vunpack.c.l.b16 %v988
        %v1009 = vpack.c.b16 %v1008, %v1007
        %1011 = vst [vmem:[#allocation3 + $0x70] sm:$0x33] %v1009
        %v1014 = vunpack.c.l.b16 %v989
        %v1015 = vunpack.c.l.b16 %v990
        %v1016 = vpack.c.b16 %v1015, %v1014
        %1018 = vst [vmem:[#allocation3 + $0x78] sm:$0x33] %v1016
        %v1019 = vld [vmem:[#allocation2] sm:$0xff]
        %v1020 = vld [vmem:[#allocation2 + $0x8] sm:$0xf]
        %v1021 = vld [vmem:[#allocation2 + $0xc] sm:$0xff]
        %v1022 = vld [vmem:[#allocation2 + $0x14] sm:$0xf]
        %v1023 = vld [vmem:[#allocation2 + $0x18] sm:$0xff]
        %v1024 = vld [vmem:[#allocation2 + $0x20] sm:$0xf]
        %v1025 = vld [vmem:[#allocation2 + $0x24] sm:$0xff]
        %v1026 = vld [vmem:[#allocation2 + $0x2c] sm:$0xf]
        %v1031 = vcombine.high %v1019, %v1019
        %v1032 = vcombine.high %v1021, %v1021
        %v1033 = vcombine.high %v1023, %v1023
        %v1034 = vcombine.high %v1025, %v1025
        %v1039 = vpack.c.bf16 %v1019, %v1019
        %v1040 = vpack.c.bf16 %v1031, %v1031
        %v1041 = vpack.c.bf16 %v1020, %v1020
        %v1042 = vpack.c.bf16 %v1021, %v1021
        %v1043 = vpack.c.bf16 %v1032, %v1032
        %v1044 = vpack.c.bf16 %v1022, %v1022
        %v1045 = vpack.c.bf16 %v1023, %v1023
        %v1046 = vpack.c.bf16 %v1033, %v1033
        %v1047 = vpack.c.bf16 %v1024, %v1024
        %v1048 = vpack.c.bf16 %v1025, %v1025
        %v1049 = vpack.c.bf16 %v1034, %v1034
        %v1050 = vpack.c.bf16 %v1026, %v1026
        %v1054 = vunpack.c.l.b16 %v1039
        %v1055 = vunpack.c.l.b16 %v1040
        %v1056 = vunpack.c.l.b16 %v1041
        %v1057 = vpack.c.b16 %v1055, %v1054
        %v1058 = vpack.c.b16 %v1056, %v1056
        %v1059 = vrot.slane %v1057, 6
        %v1060 = vrot.slane %v1058, 6
        %1061 = vrot.lane.b32.xlu0 %v1059, 95
        %v1062 = vpop.permute.xlu0 %1061
        %1063 = vrot.lane.b32.xlu0 %v1060, 95
        %v1064 = vpop.permute.xlu0 %1063
        %v1065 = vrot.slane %v1062, 4
        %v1066 = vrot.slane %v1064, 4
        %v1067 = vsel %vm416, %v1065, %v1066
        %vm1068 = vcmask 777216
        %v1069 = vsel %vm1068, %v1062, %v1067
        %1071 = vst [vmem:[#allocation3 + $0x60] sm:$0xcc] %v1069
        %v1075 = vunpack.c.l.b16 %v1042
        %v1076 = vunpack.c.l.b16 %v1043
        %v1077 = vunpack.c.l.b16 %v1044
        %v1078 = vpack.c.b16 %v1076, %v1075
        %v1079 = vpack.c.b16 %v1077, %v1077
        %v1080 = vrot.slane %v1078, 6
        %v1081 = vrot.slane %v1079, 6
        %1082 = vrot.lane.b32.xlu0 %v1080, 95
        %v1083 = vpop.permute.xlu0 %1082
        %1084 = vrot.lane.b32.xlu0 %v1081, 95
        %v1085 = vpop.permute.xlu0 %1084
        %v1086 = vrot.slane %v1083, 4
        %v1087 = vrot.slane %v1085, 4
        %v1088 = vsel %vm416, %v1086, %v1087
        %v1089 = vsel %vm1068, %v1083, %v1088
        %1091 = vst [vmem:[#allocation3 + $0x68] sm:$0xcc] %v1089
        %v1095 = vunpack.c.l.b16 %v1045
        %v1096 = vunpack.c.l.b16 %v1046
        %v1097 = vunpack.c.l.b16 %v1047
        %v1098 = vpack.c.b16 %v1096, %v1095
        %v1099 = vpack.c.b16 %v1097, %v1097
        %v1100 = vrot.slane %v1098, 6
        %v1101 = vrot.slane %v1099, 6
        %1102 = vrot.lane.b32.xlu0 %v1100, 95
        %v1103 = vpop.permute.xlu0 %1102
        %1104 = vrot.lane.b32.xlu0 %v1101, 95
        %v1105 = vpop.permute.xlu0 %1104
        %v1106 = vrot.slane %v1103, 4
        %v1107 = vrot.slane %v1105, 4
        %v1108 = vsel %vm416, %v1106, %v1107
        %v1109 = vsel %vm1068, %v1103, %v1108
        %1111 = vst [vmem:[#allocation3 + $0x70] sm:$0xcc] %v1109
        %v1115 = vunpack.c.l.b16 %v1048
        %v1116 = vunpack.c.l.b16 %v1049
        %v1117 = vunpack.c.l.b16 %v1050
        %v1118 = vpack.c.b16 %v1116, %v1115
        %v1119 = vpack.c.b16 %v1117, %v1117
        %v1120 = vrot.slane %v1118, 6
        %v1121 = vrot.slane %v1119, 6
        %1122 = vrot.lane.b32.xlu0 %v1120, 95
        %v1123 = vpop.permute.xlu0 %1122
        %1124 = vrot.lane.b32.xlu0 %v1121, 95
        %v1125 = vpop.permute.xlu0 %1124
        %v1126 = vrot.slane %v1123, 4
        %v1127 = vrot.slane %v1125, 4
        %v1128 = vsel %vm416, %v1126, %v1127
        %v1129 = vsel %vm1068, %v1123, %v1128
        %1131 = vst [vmem:[#allocation3 + $0x78] sm:$0xcc] %v1129
        %v1132 = vld [vmem:[#allocation2] sm:$0xff]
        %v1133 = vld [vmem:[#allocation2 + $0x8] sm:$0xf]
        %v1134 = vld [vmem:[#allocation2 + $0xc] sm:$0xff]
        %v1135 = vld [vmem:[#allocation2 + $0x14] sm:$0xf]
        %v1136 = vld [vmem:[#allocation2 + $0x18] sm:$0xff]
        %v1137 = vld [vmem:[#allocation2 + $0x20] sm:$0xf]
        %v1138 = vld [vmem:[#allocation2 + $0x24] sm:$0xff]
        %v1139 = vld [vmem:[#allocation2 + $0x2c] sm:$0xf]
        %v1148 = vcombine.high %v1132, %v1132
        %v1149 = vcombine.high %v1134, %v1134
        %v1150 = vcombine.high %v1136, %v1136
        %v1151 = vcombine.high %v1138, %v1138
        %1152 = vrot.lane.b32.xlu0 %v1132, 94
        %v1153 = vpop.permute.xlu0 %1152
        %1154 = vrot.lane.b32.xlu0 %v1148, 94
        %v1155 = vpop.permute.xlu0 %1154
        %1156 = vrot.lane.b32.xlu0 %v1133, 94
        %v1157 = vpop.permute.xlu0 %1156
        %1158 = vrot.lane.b32.xlu0 %v1134, 94
        %v1159 = vpop.permute.xlu0 %1158
        %1160 = vrot.lane.b32.xlu0 %v1149, 94
        %v1161 = vpop.permute.xlu0 %1160
        %1162 = vrot.lane.b32.xlu0 %v1135, 94
        %v1163 = vpop.permute.xlu0 %1162
        %1164 = vrot.lane.b32.xlu0 %v1136, 94
        %v1165 = vpop.permute.xlu0 %1164
        %1166 = vrot.lane.b32.xlu0 %v1150, 94
        %v1167 = vpop.permute.xlu0 %1166
        %1168 = vrot.lane.b32.xlu0 %v1137, 94
        %v1169 = vpop.permute.xlu0 %1168
        %1170 = vrot.lane.b32.xlu0 %v1138, 94
        %v1171 = vpop.permute.xlu0 %1170
        %1172 = vrot.lane.b32.xlu0 %v1151, 94
        %v1173 = vpop.permute.xlu0 %1172
        %1174 = vrot.lane.b32.xlu0 %v1139, 94
        %v1175 = vpop.permute.xlu0 %1174
        %vm1176 = vcmask 769024
        %v1177 = vsel %vm1176, %v1153, %v1155
        %v1178 = vsel %vm1176, %v1155, %v1157
        %v1179 = vsel %vm1176, %v1159, %v1161
        %v1180 = vsel %vm1176, %v1161, %v1163
        %v1181 = vsel %vm1176, %v1165, %v1167
        %v1182 = vsel %vm1176, %v1167, %v1169
        %v1183 = vsel %vm1176, %v1171, %v1173
        %v1184 = vsel %vm1176, %v1173, %v1175
        %v1193 = vsel %vm492, %v1177, 0.0
        %v1194 = vsel %vm493, %v1178, 0.0
        %v1195 = vsel %vm492, %v1179, 0.0
        %v1196 = vsel %vm493, %v1180, 0.0
        %v1197 = vsel %vm492, %v1181, 0.0
        %v1198 = vsel %vm493, %v1182, 0.0
        %v1199 = vsel %vm492, %v1183, 0.0
        %v1200 = vsel %vm493, %v1184, 0.0
        %v1201 = vpack.c.bf16 %v1193, %v1193
        %v1202 = vpack.c.bf16 %v1194, %v1194
        %v1203 = vpack.c.bf16 %v1195, %v1195
        %v1204 = vpack.c.bf16 %v1196, %v1196
        %v1205 = vpack.c.bf16 %v1197, %v1197
        %v1206 = vpack.c.bf16 %v1198, %v1198
        %v1207 = vpack.c.bf16 %v1199, %v1199
        %v1208 = vpack.c.bf16 %v1200, %v1200
        %v1211 = vunpack.c.l.b16 %v1201
        %v1212 = vunpack.c.l.b16 %v1202
        %v1213 = vpack.c.b16 %v1212, %v1211
        %1215 = vst [vmem:[#allocation3 + $0x80] sm:$0x33] %v1213
        %v1218 = vunpack.c.l.b16 %v1203
        %v1219 = vunpack.c.l.b16 %v1204
        %v1220 = vpack.c.b16 %v1219, %v1218
        %1222 = vst [vmem:[#allocation3 + $0x88] sm:$0x33] %v1220
        %v1225 = vunpack.c.l.b16 %v1205
        %v1226 = vunpack.c.l.b16 %v1206
        %v1227 = vpack.c.b16 %v1226, %v1225
        %1229 = vst [vmem:[#allocation3 + $0x90] sm:$0x33] %v1227
        %v1232 = vunpack.c.l.b16 %v1207
        %v1233 = vunpack.c.l.b16 %v1208
        %v1234 = vpack.c.b16 %v1233, %v1232
        %1236 = vst [vmem:[#allocation3 + $0x98] sm:$0x33] %v1234
        %v1237 = vld [vmem:[%s2] sm:$0xf]
        %v1238 = vld [vmem:[#allocation3] sm:$0xff]
        %v1239 = vld [vmem:[#allocation3 + $0x8] sm:$0xff]
        %v1240 = vld [vmem:[#allocation3 + $0x10] sm:$0xff]
        %v1241 = vld [vmem:[#allocation3 + $0x18] sm:$0xff]
        %v1242 = vld [vmem:[#allocation3 + $0x20] sm:$0xff]
        %v1243 = vld [vmem:[#allocation3 + $0x28] sm:$0xff]
        %v1244 = vld [vmem:[#allocation3 + $0x30] sm:$0xff]
        %v1245 = vld [vmem:[#allocation3 + $0x38] sm:$0xff]
        %v1246 = vld [vmem:[#allocation3 + $0x40] sm:$0xff]
        %v1247 = vld [vmem:[#allocation3 + $0x48] sm:$0xff]
        %v1248 = vld [vmem:[#allocation3 + $0x50] sm:$0xff]
        %v1249 = vld [vmem:[#allocation3 + $0x58] sm:$0xff]
        %v1250 = vld [vmem:[#allocation3 + $0x60] sm:$0xff]
        %v1251 = vld [vmem:[#allocation3 + $0x68] sm:$0xff]
        %v1252 = vld [vmem:[#allocation3 + $0x70] sm:$0xff]
        %v1253 = vld [vmem:[#allocation3 + $0x78] sm:$0xff]
        %v1254 = vld [vmem:[#allocation3 + $0x80] sm:$0x33]
        %v1255 = vld [vmem:[#allocation3 + $0x88] sm:$0x33]
        %v1256 = vld [vmem:[#allocation3 + $0x90] sm:$0x33]
        %v1257 = vld [vmem:[#allocation3 + $0x98] sm:$0x33]
        %v1258 = vld [vmem:[%s3] sm:$0xff]
        %1260 = vset.pattern.permute.xlu0 0
        %1261 = vperm.xlu0 %1260, %v1258
        %v1262 = vpop.permute.xlu0 %1261
        %v1284 = vunpack.c.l.b16 %v1238
        %v1285 = vunpack.c.h.b16 %v1238
        %v1286 = vunpack.c.l.b16 %v1239
        %v1287 = vunpack.c.h.b16 %v1239
        %v1288 = vunpack.c.l.b16 %v1240
        %v1289 = vunpack.c.h.b16 %v1240
        %v1290 = vunpack.c.l.b16 %v1241
        %v1291 = vunpack.c.h.b16 %v1241
        %v1292 = vunpack.c.l.b16 %v1242
        %v1293 = vunpack.c.h.b16 %v1242
        %v1294 = vunpack.c.l.b16 %v1243
        %v1295 = vunpack.c.h.b16 %v1243
        %v1296 = vunpack.c.l.b16 %v1244
        %v1297 = vunpack.c.h.b16 %v1244
        %v1298 = vunpack.c.l.b16 %v1245
        %v1299 = vunpack.c.h.b16 %v1245
        %v1300 = vunpack.c.l.b16 %v1246
        %v1301 = vunpack.c.h.b16 %v1246
        %v1302 = vunpack.c.l.b16 %v1247
        %v1303 = vunpack.c.h.b16 %v1247
        %v1304 = vunpack.c.l.b16 %v1248
        %v1305 = vunpack.c.h.b16 %v1248
        %v1306 = vunpack.c.l.b16 %v1249
        %v1307 = vunpack.c.h.b16 %v1249
        %v1308 = vunpack.c.l.b16 %v1250
        %v1309 = vunpack.c.h.b16 %v1250
        %v1310 = vunpack.c.l.b16 %v1251
        %v1311 = vunpack.c.h.b16 %v1251
        %v1312 = vunpack.c.l.b16 %v1252
        %v1313 = vunpack.c.h.b16 %v1252
        %v1314 = vunpack.c.l.b16 %v1253
        %v1315 = vunpack.c.h.b16 %v1253
        %v1316 = vunpack.c.l.b16 %v1254
        %v1317 = vunpack.c.h.b16 %v1254
        %v1318 = vunpack.c.l.b16 %v1255
        %v1319 = vunpack.c.h.b16 %v1255
        %v1320 = vunpack.c.l.b16 %v1256
        %v1321 = vunpack.c.h.b16 %v1256
        %v1322 = vunpack.c.l.b16 %v1257
        %v1323 = vunpack.c.h.b16 %v1257
        %v1324 = vpack.c.b16 %v1292, %v1284
        %v1325 = vpack.c.b16 %v1293, %v1285
        %v1326 = vpack.c.b16 %v1294, %v1286
        %v1327 = vpack.c.b16 %v1295, %v1287
        %v1328 = vpack.c.b16 %v1296, %v1288
        %v1329 = vpack.c.b16 %v1297, %v1289
        %v1330 = vpack.c.b16 %v1298, %v1290
        %v1331 = vpack.c.b16 %v1299, %v1291
        %v1332 = vpack.c.b16 %v1308, %v1300
        %v1333 = vpack.c.b16 %v1309, %v1301
        %v1334 = vpack.c.b16 %v1310, %v1302
        %v1335 = vpack.c.b16 %v1311, %v1303
        %v1336 = vpack.c.b16 %v1312, %v1304
        %v1337 = vpack.c.b16 %v1313, %v1305
        %v1338 = vpack.c.b16 %v1314, %v1306
        %v1339 = vpack.c.b16 %v1315, %v1307
        %v1340 = vpack.c.b16 %v1316, %v1316
        %v1341 = vpack.c.b16 %v1317, %v1317
        %v1342 = vpack.c.b16 %v1318, %v1318
        %v1343 = vpack.c.b16 %v1319, %v1319
        %v1344 = vpack.c.b16 %v1320, %v1320
        %v1345 = vpack.c.b16 %v1321, %v1321
        %v1346 = vpack.c.b16 %v1322, %v1322
        %v1347 = vpack.c.b16 %v1323, %v1323
        %vm1364 = vcmask 293888
        %v1366 = vsel %vm1364, %v1237, 0
        %vm1368 = vcmask 1041408
        %v1370 = vsel %vm1368, %v1340, 0
        %v1373 = vsel %vm1368, %v1341, 0
        %v1376 = vsel %vm1368, %v1342, 0
        %v1379 = vsel %vm1368, %v1343, 0
        %v1382 = vsel %vm1368, %v1344, 0
        %v1385 = vsel %vm1368, %v1345, 0
        %v1388 = vsel %vm1368, %v1346, 0
        %v1391 = vsel %vm1368, %v1347, 0
        %1393 = vmatprep.subr.bf16.mxu0 %v1325
        %1394 = vmatpush1.bf16.msra.mxu0 %v1324
        %1395 = vmatprep.subr.bf16.mxu0 %v1333
        %1396 = vmatpush1.bf16.msra.mxu0 %v1332
        %1397 = vmatprep.subr.bf16.mxu0 %v1373
        %1398 = vmatpush1.bf16.msra.mxu0 %v1370
        %1399 = vmatprep.subr.bf16.mxu0 0
        %1400 = vmatpush1.bf16.msra.mxu0 0
        %1401 = vmatprep.subr.bf16.mxu0 0
        %1402 = vmatpush1.bf16.msra.mxu0 0
        %1403 = vmatprep.subr.bf16.mxu0 0
        %1404 = vmatpush1.bf16.msra.mxu0 0
        %1405 = vmatprep.subr.bf16.mxu0 0
        %1406 = vmatpush1.bf16.msra.mxu0 0
        %1407 = vmatprep.subr.bf16.mxu0 0
        %1408 = vmatpush1.bf16.msra.mxu0 0
        %1409 = vmatprep.subr.bf16.mxu0 0
        %1410 = vmatpush1.bf16.msra.mxu0 0
        %1411 = vmatprep.subr.bf16.mxu0 0
        %1412 = vmatpush1.bf16.msra.mxu0 0
        %1413 = vmatprep.subr.bf16.mxu0 0
        %1414 = vmatpush1.bf16.msra.mxu0 0
        %1415 = vmatprep.subr.bf16.mxu0 0
        %1416 = vmatpush1.bf16.msra.mxu0 0
        %1417 = vmatprep.subr.bf16.mxu0 0
        %1418 = vmatpush1.bf16.msra.mxu0 0
        %1419 = vmatprep.subr.bf16.mxu0 0
        %1420 = vmatpush1.bf16.msra.mxu0 0
        %1421 = vmatprep.subr.bf16.mxu0 0
        %1422 = vmatpush1.bf16.msra.mxu0 0
        %1423 = vmatprep.subr.bf16.mxu0 0
        %1424 = vmatpush1.bf16.msra.mxu0 0
        %1425 = vmatprep.mubr.bf16.mxu0 0
        %1426 = vmatmul.mubr.bf16.gmra.mrb[0].mxu0 %v1366
        %v1427 = vpop.f32.mrb[0].mxu0
        %v1428 = vadd.f32 %v1262, %v1427
        %v1429 = vpop.f32.mrb[0].mxu0
        %v1430 = vadd.f32 %v1262, %v1429
        %v1431 = vpop.f32.mrb[0].mxu0
        %v1432 = vpop.f32.mrb[0].mxu0
        %1433 = vdwg.mxu0
        %1434 = vmatprep.subr.bf16.mxu0 %v1327
        %1435 = vmatpush1.bf16.msra.mxu0 %v1326
        %1436 = vmatprep.subr.bf16.mxu0 %v1335
        %1437 = vmatpush1.bf16.msra.mxu0 %v1334
        %1438 = vmatprep.subr.bf16.mxu0 %v1379
        %1439 = vmatpush1.bf16.msra.mxu0 %v1376
        %1440 = vmatprep.subr.bf16.mxu0 0
        %1441 = vmatpush1.bf16.msra.mxu0 0
        %1442 = vmatprep.subr.bf16.mxu0 0
        %1443 = vmatpush1.bf16.msra.mxu0 0
        %1444 = vmatprep.subr.bf16.mxu0 0
        %1445 = vmatpush1.bf16.msra.mxu0 0
        %1446 = vmatprep.subr.bf16.mxu0 0
        %1447 = vmatpush1.bf16.msra.mxu0 0
        %1448 = vmatprep.subr.bf16.mxu0 0
        %1449 = vmatpush1.bf16.msra.mxu0 0
        %1450 = vmatprep.subr.bf16.mxu0 0
        %1451 = vmatpush1.bf16.msra.mxu0 0
        %1452 = vmatprep.subr.bf16.mxu0 0
        %1453 = vmatpush1.bf16.msra.mxu0 0
        %1454 = vmatprep.subr.bf16.mxu0 0
        %1455 = vmatpush1.bf16.msra.mxu0 0
        %1456 = vmatprep.subr.bf16.mxu0 0
        %1457 = vmatpush1.bf16.msra.mxu0 0
        %1458 = vmatprep.subr.bf16.mxu0 0
        %1459 = vmatpush1.bf16.msra.mxu0 0
        %1460 = vmatprep.subr.bf16.mxu0 0
        %1461 = vmatpush1.bf16.msra.mxu0 0
        %1462 = vmatprep.subr.bf16.mxu0 0
        %1463 = vmatpush1.bf16.msra.mxu0 0
        %1464 = vmatprep.subr.bf16.mxu0 0
        %1465 = vmatpush1.bf16.msra.mxu0 0
        %1466 = vmatprep.mubr.bf16.mxu0 0
        %1467 = vmatmul.mubr.bf16.gmra.mrb[0].mxu0 %v1366
        %v1468 = vpop.f32.mrb[0].mxu0
        %v1469 = vadd.f32 %v1262, %v1468
        %v1470 = vpop.f32.mrb[0].mxu0
        %v1471 = vadd.f32 %v1262, %v1470
        %v1472 = vpop.f32.mrb[0].mxu0
        %v1473 = vpop.f32.mrb[0].mxu0
        %1474 = vdwg.mxu0
        %1475 = vmatprep.subr.bf16.mxu0 %v1329
        %1476 = vmatpush1.bf16.msra.mxu0 %v1328
        %1477 = vmatprep.subr.bf16.mxu0 %v1337
        %1478 = vmatpush1.bf16.msra.mxu0 %v1336
        %1479 = vmatprep.subr.bf16.mxu0 %v1385
        %1480 = vmatpush1.bf16.msra.mxu0 %v1382
        %1481 = vmatprep.subr.bf16.mxu0 0
        %1482 = vmatpush1.bf16.msra.mxu0 0
        %1483 = vmatprep.subr.bf16.mxu0 0
        %1484 = vmatpush1.bf16.msra.mxu0 0
        %1485 = vmatprep.subr.bf16.mxu0 0
        %1486 = vmatpush1.bf16.msra.mxu0 0
        %1487 = vmatprep.subr.bf16.mxu0 0
        %1488 = vmatpush1.bf16.msra.mxu0 0
        %1489 = vmatprep.subr.bf16.mxu0 0
        %1490 = vmatpush1.bf16.msra.mxu0 0
        %1491 = vmatprep.subr.bf16.mxu0 0
        %1492 = vmatpush1.bf16.msra.mxu0 0
        %1493 = vmatprep.subr.bf16.mxu0 0
        %1494 = vmatpush1.bf16.msra.mxu0 0
        %1495 = vmatprep.subr.bf16.mxu0 0
        %1496 = vmatpush1.bf16.msra.mxu0 0
        %1497 = vmatprep.subr.bf16.mxu0 0
        %1498 = vmatpush1.bf16.msra.mxu0 0
        %1499 = vmatprep.subr.bf16.mxu0 0
        %1500 = vmatpush1.bf16.msra.mxu0 0
        %1501 = vmatprep.subr.bf16.mxu0 0
        %1502 = vmatpush1.bf16.msra.mxu0 0
        %1503 = vmatprep.subr.bf16.mxu0 0
        %1504 = vmatpush1.bf16.msra.mxu0 0
        %1505 = vmatprep.subr.bf16.mxu0 0
        %1506 = vmatpush1.bf16.msra.mxu0 0
        %1507 = vmatprep.mubr.bf16.mxu0 0
        %1508 = vmatmul.mubr.bf16.gmra.mrb[0].mxu0 %v1366
        %v1509 = vpop.f32.mrb[0].mxu0
        %v1510 = vadd.f32 %v1262, %v1509
        %v1511 = vpop.f32.mrb[0].mxu0
        %v1512 = vadd.f32 %v1262, %v1511
        %v1513 = vpop.f32.mrb[0].mxu0
        %v1514 = vpop.f32.mrb[0].mxu0
        %1515 = vdwg.mxu0
        %1516 = vmatprep.subr.bf16.mxu0 %v1331
        %1517 = vmatpush1.bf16.msra.mxu0 %v1330
        %1518 = vmatprep.subr.bf16.mxu0 %v1339
        %1519 = vmatpush1.bf16.msra.mxu0 %v1338
        %1520 = vmatprep.subr.bf16.mxu0 %v1391
        %1521 = vmatpush1.bf16.msra.mxu0 %v1388
        %1522 = vmatprep.subr.bf16.mxu0 0
        %1523 = vmatpush1.bf16.msra.mxu0 0
        %1524 = vmatprep.subr.bf16.mxu0 0
        %1525 = vmatpush1.bf16.msra.mxu0 0
        %1526 = vmatprep.subr.bf16.mxu0 0
        %1527 = vmatpush1.bf16.msra.mxu0 0
        %1528 = vmatprep.subr.bf16.mxu0 0
        %1529 = vmatpush1.bf16.msra.mxu0 0
        %1530 = vmatprep.subr.bf16.mxu0 0
        %1531 = vmatpush1.bf16.msra.mxu0 0
        %1532 = vmatprep.subr.bf16.mxu0 0
        %1533 = vmatpush1.bf16.msra.mxu0 0
        %1534 = vmatprep.subr.bf16.mxu0 0
        %1535 = vmatpush1.bf16.msra.mxu0 0
        %1536 = vmatprep.subr.bf16.mxu0 0
        %1537 = vmatpush1.bf16.msra.mxu0 0
        %1538 = vmatprep.subr.bf16.mxu0 0
        %1539 = vmatpush1.bf16.msra.mxu0 0
        %1540 = vmatprep.subr.bf16.mxu0 0
        %1541 = vmatpush1.bf16.msra.mxu0 0
        %1542 = vmatprep.subr.bf16.mxu0 0
        %1543 = vmatpush1.bf16.msra.mxu0 0
        %1544 = vmatprep.subr.bf16.mxu0 0
        %1545 = vmatpush1.bf16.msra.mxu0 0
        %1546 = vmatprep.subr.bf16.mxu0 0
        %1547 = vmatpush1.bf16.msra.mxu0 0
        %1548 = vmatprep.mubr.bf16.mxu0 0
        %1549 = vmatmul.mubr.bf16.gmra.mrb[0].mxu0 %v1366
        %v1550 = vpop.f32.mrb[0].mxu0
        %v1551 = vadd.f32 %v1262, %v1550
        %v1552 = vpop.f32.mrb[0].mxu0
        %v1553 = vadd.f32 %v1262, %v1552
        %v1554 = vpop.f32.mrb[0].mxu0
        %v1555 = vpop.f32.mrb[0].mxu0
        %1556 = vdwg.mxu0
        %1557 = vst [vmem:[#allocation4] sm:$0xff] %v1428
        %1558 = vst [vmem:[#allocation4 + $0x8] sm:$0xff] %v1430
        %1559 = vst [vmem:[#allocation4 + $0x10] sm:$0xff] %v1469
        %1560 = vst [vmem:[#allocation4 + $0x18] sm:$0xff] %v1471
        %1561 = vst [vmem:[#allocation4 + $0x20] sm:$0xff] %v1510
        %1562 = vst [vmem:[#allocation4 + $0x28] sm:$0xff] %v1512
        %1563 = vst [vmem:[#allocation4 + $0x30] sm:$0xff] %v1551
        %1564 = vst [vmem:[#allocation4 + $0x38] sm:$0xff] %v1553
        %s1565 = smul.f32 %s218, 0.5
        %v1566 = vstv %s1565
        %v1567 = vadd.f32 %v1566, 0.0
        %v1568 = vld [vmem:[#allocation4] sm:$0xff]
        %v1569 = vld [vmem:[#allocation4 + $0x8] sm:$0xff]
        %v1570 = vadd.f32 %v1567, %v1568
        %v1571 = vadd.f32 %v1567, %v1569
        %v1572 = vstv %s218
        %vm1573 = vcmp.ge.f32.partialorder %v1570, %v1572
        %vm1574 = vcmp.ge.f32.partialorder %v1571, %v1572
        %v1575 = vsel %vm1573, 1, 0
        %v1576 = vsel %vm1574, 1, 0
        %v1577 = vcvt.s32.f32 %v1575
        %v1578 = vcvt.s32.f32 %v1576
        %v1579 = vmul.f32 %v1577, %v1572
        %v1580 = vmul.f32 %v1578, %v1572
        %v1581 = vsub.f32 %v1570, %v1579
        %v1582 = vsub.f32 %v1571, %v1580
        %v1583 = vadd.f32 %v1577, 0.0
        %v1584 = vadd.f32 %v1578, 0.0
        %vm1585 = vcmp.le.f32.partialorder %v1581, -0.001
        %vm1586 = vcmp.le.f32.partialorder %v1582, -0.001
        %vm1587 = vcmp.gt.f32.partialorder %v1583, 0.0
        %vm1588 = vcmp.gt.f32.partialorder %v1584, 0.0
        %vm1589 = vmand %vm1585, %vm1587
        %vm1590 = vmand %vm1586, %vm1588
        %v1591 = vsel %vm1589, 1, 0
        %v1592 = vsel %vm1590, 1, 0
        %v1593 = vcvt.s32.f32 %v1591
        %v1594 = vcvt.s32.f32 %v1592
        %v1595 = vmul.f32 %v1593, %v1572
        %v1596 = vmul.f32 %v1594, %v1572
        %v1597 = vadd.f32 %v1581, %v1595
        %v1598 = vadd.f32 %v1582, %v1596
        %v1599 = vsub.f32 %v1583, %v1593
        %v1600 = vsub.f32 %v1584, %v1594
        %v1601 = vsub.f32 %v1577, %v1593
        %v1602 = vsub.f32 %v1578, %v1594
        %v1603 = vmul.f32 %v1601, %v1572
        %v1604 = vmul.f32 %v1602, %v1572
        %v1605 = vpack.c.bf16 %v1603, %v1603
        %v1606 = vpack.c.bf16 %v1604, %v1604
        %v1609 = vunpack.c.l.b16 %v1605
        %v1610 = vunpack.c.l.b16 %v1606
        %v1611 = vpack.c.b16 %v1610, %v1609
        %1613 = vst [vmem:[%s216] sm:$0xff] %v1611
        %v1614 = vld [vmem:[#allocation4 + $0x10] sm:$0xff]
        %v1615 = vld [vmem:[#allocation4 + $0x18] sm:$0xff]
        %v1616 = vadd.f32 %v1597, %v1614
        %v1617 = vadd.f32 %v1598, %v1615
        %vm1618 = vcmp.ge.f32.partialorder %v1616, %v1572
        %vm1619 = vcmp.ge.f32.partialorder %v1617, %v1572
        %v1620 = vsel %vm1618, 1, 0
        %v1621 = vsel %vm1619, 1, 0
        %v1622 = vcvt.s32.f32 %v1620
        %v1623 = vcvt.s32.f32 %v1621
        %v1624 = vmul.f32 %v1622, %v1572
        %v1625 = vmul.f32 %v1623, %v1572
        %v1626 = vsub.f32 %v1616, %v1624
        %v1627 = vsub.f32 %v1617, %v1625
        %v1628 = vadd.f32 %v1599, %v1622
        %v1629 = vadd.f32 %v1600, %v1623
        %vm1630 = vcmp.le.f32.partialorder %v1626, -0.001
        %vm1631 = vcmp.le.f32.partialorder %v1627, -0.001
        %vm1632 = vcmp.gt.f32.partialorder %v1628, 0.0
        %vm1633 = vcmp.gt.f32.partialorder %v1629, 0.0
        %vm1634 = vmand %vm1630, %vm1632
        %vm1635 = vmand %vm1631, %vm1633
        %v1636 = vsel %vm1634, 1, 0
        %v1637 = vsel %vm1635, 1, 0
        %v1638 = vcvt.s32.f32 %v1636
        %v1639 = vcvt.s32.f32 %v1637
        %v1640 = vmul.f32 %v1638, %v1572
        %v1641 = vmul.f32 %v1639, %v1572
        %v1642 = vadd.f32 %v1626, %v1640
        %v1643 = vadd.f32 %v1627, %v1641
        %v1644 = vsub.f32 %v1628, %v1638
        %v1645 = vsub.f32 %v1629, %v1639
        %v1646 = vsub.f32 %v1622, %v1638
        %v1647 = vsub.f32 %v1623, %v1639
        %v1648 = vmul.f32 %v1646, %v1572
        %v1649 = vmul.f32 %v1647, %v1572
        %v1650 = vpack.c.bf16 %v1648, %v1648
        %v1651 = vpack.c.bf16 %v1649, %v1649
        %v1654 = vunpack.c.l.b16 %v1650
        %v1655 = vunpack.c.l.b16 %v1651
        %v1656 = vpack.c.b16 %v1655, %v1654
        %s1658 = scalar_lea.vmem %s216, 8 [#allocation9]
        %1659 = vst [vmem:[%s1658] sm:$0xff] %v1656
        %v1660 = vld [vmem:[#allocation4 + $0x20] sm:$0xff]
        %v1661 = vld [vmem:[#allocation4 + $0x28] sm:$0xff]
        %v1662 = vadd.f32 %v1642, %v1660
        %v1663 = vadd.f32 %v1643, %v1661
        %vm1664 = vcmp.ge.f32.partialorder %v1662, %v1572
        %vm1665 = vcmp.ge.f32.partialorder %v1663, %v1572
        %v1666 = vsel %vm1664, 1, 0
        %v1667 = vsel %vm1665, 1, 0
        %v1668 = vcvt.s32.f32 %v1666
        %v1669 = vcvt.s32.f32 %v1667
        %v1670 = vmul.f32 %v1668, %v1572
        %v1671 = vmul.f32 %v1669, %v1572
        %v1672 = vsub.f32 %v1662, %v1670
        %v1673 = vsub.f32 %v1663, %v1671
        %v1674 = vadd.f32 %v1644, %v1668
        %v1675 = vadd.f32 %v1645, %v1669
        %vm1676 = vcmp.le.f32.partialorder %v1672, -0.001
        %vm1677 = vcmp.le.f32.partialorder %v1673, -0.001
        %vm1678 = vcmp.gt.f32.partialorder %v1674, 0.0
        %vm1679 = vcmp.gt.f32.partialorder %v1675, 0.0
        %vm1680 = vmand %vm1676, %vm1678
        %vm1681 = vmand %vm1677, %vm1679
        %v1682 = vsel %vm1680, 1, 0
        %v1683 = vsel %vm1681, 1, 0
        %v1684 = vcvt.s32.f32 %v1682
        %v1685 = vcvt.s32.f32 %v1683
        %v1686 = vmul.f32 %v1684, %v1572
        %v1687 = vmul.f32 %v1685, %v1572
        %v1688 = vadd.f32 %v1672, %v1686
        %v1689 = vadd.f32 %v1673, %v1687
        %v1690 = vsub.f32 %v1674, %v1684
        %v1691 = vsub.f32 %v1675, %v1685
        %v1692 = vsub.f32 %v1668, %v1684
        %v1693 = vsub.f32 %v1669, %v1685
        %v1694 = vmul.f32 %v1692, %v1572
        %v1695 = vmul.f32 %v1693, %v1572
        %v1696 = vpack.c.bf16 %v1694, %v1694
        %v1697 = vpack.c.bf16 %v1695, %v1695
        %v1700 = vunpack.c.l.b16 %v1696
        %v1701 = vunpack.c.l.b16 %v1697
        %v1702 = vpack.c.b16 %v1701, %v1700
        %s1704 = scalar_lea.vmem %s216, 16 [#allocation9]
        %1705 = vst [vmem:[%s1704] sm:$0xff] %v1702
        %v1706 = vld [vmem:[#allocation4 + $0x30] sm:$0xff]
        %v1707 = vld [vmem:[#allocation4 + $0x38] sm:$0xff]
        %v1708 = vadd.f32 %v1688, %v1706
        %v1709 = vadd.f32 %v1689, %v1707
        %vm1710 = vcmp.ge.f32.partialorder %v1708, %v1572
        %vm1711 = vcmp.ge.f32.partialorder %v1709, %v1572
        %v1712 = vsel %vm1710, 1, 0
        %v1713 = vsel %vm1711, 1, 0
        %v1714 = vcvt.s32.f32 %v1712
        %v1715 = vcvt.s32.f32 %v1713
        %v1716 = vmul.f32 %v1714, %v1572
        %v1717 = vmul.f32 %v1715, %v1572
        %v1718 = vsub.f32 %v1708, %v1716
        %v1719 = vsub.f32 %v1709, %v1717
        %v1720 = vadd.f32 %v1690, %v1714
        %v1721 = vadd.f32 %v1691, %v1715
        %vm1722 = vcmp.le.f32.partialorder %v1718, -0.001
        %vm1723 = vcmp.le.f32.partialorder %v1719, -0.001
        %vm1724 = vcmp.gt.f32.partialorder %v1720, 0.0
        %vm1725 = vcmp.gt.f32.partialorder %v1721, 0.0
        %vm1726 = vmand %vm1722, %vm1724
        %vm1727 = vmand %vm1723, %vm1725
        %v1728 = vsel %vm1726, 1, 0
        %v1729 = vsel %vm1727, 1, 0
        %v1730 = vcvt.s32.f32 %v1728
        %v1731 = vcvt.s32.f32 %v1729
        %v1732 = vsub.f32 %v1714, %v1730
        %v1733 = vsub.f32 %v1715, %v1731
        %v1734 = vmul.f32 %v1732, %v1572
        %v1735 = vmul.f32 %v1733, %v1572
        %v1736 = vpack.c.bf16 %v1734, %v1734
        %v1737 = vpack.c.bf16 %v1735, %v1735
        %v1740 = vunpack.c.l.b16 %v1736
        %v1741 = vunpack.c.l.b16 %v1737
        %v1742 = vpack.c.b16 %v1741, %v1740
        %s1744 = scalar_lea.vmem %s216, 24 [#allocation9]
        %1745 = vst [vmem:[%s1744] sm:$0xff] %v1742
        %s1746 = sand.u32 %s119, 1
        %s1747 = scalar_lea.sflag [#allocation8], %s1746
        %s1748 = sand.u32 %s119, 1
        %s1749 = smul.addr %s1748, 32
        %s1750 = scalar_lea.vmem [#allocation9], %s1749
        // Predicated region
        $region41: #{tpu_custom_call.1} parent=35 // pred_check
          %p1751 = pneg %p129
        $region42: #{tpu_custom_call.1} parent=35 // pred_check_branch
          %1753 = sbr.rel (%p1751) target = $region44
        $region43: #{tpu_custom_call.1} parent=35 // pred_region
          %s1755 = ssub.s32 512, 512
          %1756 = vsyncadd %s1747, %s1755
          %s1757 = smul.addr %s22, 8
          %s1758 = smul.addr %s1757, 64
          %s1759 = scalar_lea.hbm %s4, %s1758
          %s1760 = sshll.u32 %s1750, 4
          %s1761 = int_to_ptr.vmem [resolvable:$true] %s1760
          %1766 = dma.vmem_to_hbm [thread:$0]  %s1761, 512, %s1759, %s1747, 128, 128, 8
        $region44: #{tpu_custom_call.1} parent=35 // pred_fallthru
          _
      $region36: #{tpu_custom_call.1} parent=5 // pred_fallthru
        _
      %p1767 = scmp.le.s32.totalorder 2, %s17
      // Predicated region
      $region45: #{tpu_custom_call.1} parent=5 // pred_check
        %p1768 = pneg %p1767
      $region46: #{tpu_custom_call.1} parent=5 // pred_check_branch
        %1770 = sbr.rel (%p1768) target = $region48
      $region47: #{tpu_custom_call.1} parent=5 // pred_region
        %s1771 = ssub.s32 %s17, 2
        // Predicated region
        $region49: #{tpu_custom_call.1} parent=47 // pred_check
          %p1772 = pneg %p135
        $region50: #{tpu_custom_call.1} parent=47 // pred_check_branch
          %1774 = sbr.rel (%p1772) target = $region52
        $region51: #{tpu_custom_call.1} parent=47 // pred_region
          %s1775 = sand.u32 %s120, 1
          %s1776 = scalar_lea.sflag [#allocation8], %s1775
          %s1777 = sand.u32 %s120, 1
          %s1778 = smul.addr %s1777, 32
          %s1779 = scalar_lea.vmem [#allocation9], %s1778
          %1780 = dma.done %s1776, 512
        $region52: #{tpu_custom_call.1} parent=47 // pred_fallthru
          _
      $region48: #{tpu_custom_call.1} parent=5 // pred_fallthru
        _
    $region6: #{tpu_custom_call.1} parent=1 // loop_footer
      %s21 = sadd.s32 1, %s17
    $region7: #{tpu_custom_call.1} parent=1 // loop_footer_branch
      %16 = sbr.rel target = $region3
    $region8: #{tpu_custom_call.1} parent=1 // loop_exit
      _
    %1781 = vsyncpa [#allocation7], 1
    %s1782 = scalar_lea.sflag [#allocation7], 1
    %1783 = vsyncpa %s1782, 1
    %1784 = vsyncpa [#allocation8], 1
    %s1785 = scalar_lea.sflag [#allocation8], 1
    %1786 = vsyncpa %s1785, 1

</llo_original>
